<compile_context>
chip_gen: v7x
topology: tpu7x:2x2x1
jax: 0.10.0
libtpu: 0.0.40
codegen_flags: <defaults>
</compile_context>

<pallas_src>
import math
from functools import partial

import jax
import jax.numpy as jnp
from jax.experimental import pallas as pl
from jax.experimental.pallas import tpu as pltpu


def _decoder_act_kernel(xs_ref, enc_ref, mask_ref, w_ref, b_ref, pred_ref, hid_ref):
    B, S, H = enc_ref.shape
    OUT = pred_ref.shape[1]

    # ---- activations (packed slab: rows [0:B)=x, [B:2B)=s0, [2B:3B)=s1) ----
    x = xs_ref[0:B, :]                 # [B, H]  embedded dec_input (dropout = identity)
    s0 = xs_ref[B:2 * B, :]            # [B, H]
    s1 = xs_ref[2 * B:3 * B, :]        # [B, H]
    enc = enc_ref[...]                 # [B, S, H]
    mask = mask_ref[...]               # [B, S]  float 0/1

    # ---- weight slab views (static, sublane-aligned slices) ----
    wq_t = w_ref[0 * H:1 * H, 0:H]     # [H, H]   query weight (transposed)
    wk_f = w_ref[1 * H:2 * H, 0:H]     # [H, H]   key weight (NOT transposed; folded use)
    wih0_x = w_ref[2 * H:3 * H, :]     # [H, 3H]  GRU0 input weights, x block
    wih0_c = w_ref[3 * H:4 * H, :]     # [H, 3H]  GRU0 input weights, c block
    whh0 = w_ref[4 * H:5 * H, :]       # [H, 3H]
    wih1 = w_ref[5 * H:6 * H, :]       # [H, 3H]
    whh1 = w_ref[6 * H:7 * H, :]       # [H, 3H]
    wf_h = w_ref[7 * H:8 * H, 0:OUT]   # [H, OUT] fc_out, dec_output block
    wf_c = w_ref[8 * H:9 * H, 0:OUT]   # [H, OUT] fc_out, context block
    wf_x = w_ref[9 * H:10 * H, 0:OUT]  # [H, OUT] fc_out, embedded-input block

    bq = b_ref[0:1, 0:H]
    bk = b_ref[1:2, 0:H]
    bih0 = b_ref[2:3, :]
    bhh0 = b_ref[3:4, :]
    bih1 = b_ref[4:5, :]
    bhh1 = b_ref[5:6, :]
    bf = b_ref[6:7, 0:OUT]

    # ---------------- Attention (transpose-free, [B,S] layout) ----------------
    s_mean = 0.5 * (s0 + s1)                                                   # [B, H]
    q = jnp.dot(s_mean, wq_t, preferred_element_type=jnp.float32) + bq         # [B, H]
    # fold the key projection into the query:  q·(Wk e + bk) = (q Wk)·e + q·bk
    qt = jnp.dot(q, wk_f, preferred_element_type=jnp.float32)                  # [B, H]
    qb = jnp.sum(q * bk, axis=-1, keepdims=True)                               # [B, 1]

    inv_sqrt_h = 1.0 / math.sqrt(H)
    scores = (jnp.sum(qt[:, None, :] * enc, axis=-1) + qb) * inv_sqrt_h        # [B, S]
    scores = jnp.where(mask > 0.5, scores, jnp.float32(-1e30))                 # finite sentinel

    m = jnp.max(scores, axis=-1, keepdims=True)
    e = jnp.exp(scores - m)
    probs = e / jnp.sum(e, axis=-1, keepdims=True)                             # [B, S]
    c = jnp.sum(probs[:, :, None] * enc, axis=1)                               # [B, H]

    # ---------------- 2-layer GRU (seq len 1), fused gates ----------------
    # gate layout along lanes: [0:H)=r, [H:2H)=z, [2H:3H)=n  (PyTorch order)
    gi0 = (jnp.dot(x, wih0_x, preferred_element_type=jnp.float32)
           + jnp.dot(c, wih0_c, preferred_element_type=jnp.float32) + bih0)    # [B, 3H]
    gh0 = jnp.dot(s0, whh0, preferred_element_type=jnp.float32) + bhh0         # [B, 3H]
    g0 = gi0 + gh0
    r0 = jax.nn.sigmoid(g0[:, 0:H])
    z0 = jax.nn.sigmoid(g0[:, H:2 * H])
    n0 = jnp.tanh(gi0[:, 2 * H:] + r0 * gh0[:, 2 * H:])
    h0 = (1.0 - z0) * n0 + z0 * s0

    gi1 = jnp.dot(h0, wih1, preferred_element_type=jnp.float32) + bih1
    gh1 = jnp.dot(s1, whh1, preferred_element_type=jnp.float32) + bhh1
    g1 = gi1 + gh1
    r1 = jax.nn.sigmoid(g1[:, 0:H])
    z1 = jax.nn.sigmoid(g1[:, H:2 * H])
    n1 = jnp.tanh(gi1[:, 2 * H:] + r1 * gh1[:, 2 * H:])
    h1 = (1.0 - z1) * n1 + z1 * s1
    # (inter-layer GRU dropout only applies in training; identity here)

    # ---------------- Output projection (K-split, no lane concat) ----------------
    pred = (jnp.dot(h1, wf_h, preferred_element_type=jnp.float32)
            + jnp.dot(c, wf_c, preferred_element_type=jnp.float32)
            + jnp.dot(x, wf_x, preferred_element_type=jnp.float32) + bf)       # [B, OUT]

    pred_ref[...] = pred
    hid_ref[0] = h0
    hid_ref[1] = h1


def prepare_decoder_act_params(params):
    """One-time packing of all weights/biases into two VMEM-friendly slabs.

    Hoisted out of the per-token decode path: the per-step wrapper only does the
    embedding gather, the enc transpose and the mask tile."""
    H = params["wq"].shape[0]
    W3 = 3 * H
    f32 = jnp.float32

    def padc(w):                      # [H, n] -> [H, 3H]
        w = jnp.asarray(w, f32)
        return jnp.pad(w, ((0, 0), (0, W3 - w.shape[1])))

    def padr(b):                      # [n] -> [1, 3H]
        b = jnp.asarray(b, f32)
        return jnp.pad(b, (0, W3 - b.shape[0]))[None, :]

    wq_t = params["wq"].T                       # q = s_mean @ wq.T + bq
    wk_f = params["wk"]                         # folded key projection: qt = q @ wk
    wih0_x = params["wih0"][:, :H].T            # [H, 3H]  (rnn_input = [x | c], x first)
    wih0_c = params["wih0"][:, H:].T            # [H, 3H]
    whh0_t = params["whh0"].T
    wih1_t = params["wih1"].T
    whh1_t = params["whh1"].T
    wf_h = params["wf"][:, :H].T                # [H, OUT] (feat = [h1 | c | x])
    wf_c = params["wf"][:, H:2 * H].T
    wf_x = params["wf"][:, 2 * H:].T

    w_slab = jnp.concatenate(
        [padc(wq_t), padc(wk_f),
         jnp.asarray(wih0_x, f32), jnp.asarray(wih0_c, f32), jnp.asarray(whh0_t, f32),
         jnp.asarray(wih1_t, f32), jnp.asarray(whh1_t, f32),
         padc(wf_h), padc(wf_c), padc(wf_x)], axis=0)                 # [10H, 3H]

    b_slab = jnp.concatenate(
        [padr(params["bq"]), padr(params["bk"]),
         padr(params["bih0"]), padr(params["bhh0"]),
         padr(params["bih1"]), padr(params["bhh1"]),
         padr(params["bf"])], axis=0)                                 # [7, 3H]

    return {"embedding": jnp.asarray(params["embedding"], f32),
            "w_slab": w_slab, "b_slab": b_slab}


@partial(jax.jit, static_argnames=("out_dim",))
def decoder_act_forward(dec_input, s, enc_output, mask, packed, *, out_dim):
    x = packed["embedding"][dec_input].astype(jnp.float32)            # [B, H]; dropout = id
    L, B, H = s.shape
    assert L == 2, "kernel hard-codes num_layers == 2"
    S = enc_output.shape[0]

    # PyTorch: mask.repeat((1, 1, num_attr))
    num_attr = S // mask.shape[1]
    mask_f = jnp.tile(mask.astype(jnp.float32), (1, num_attr))        # [B, S]

    xs = jnp.concatenate([x, s.astype(jnp.float32).reshape(L * B, H)], axis=0)  # [(1+L)B, H]
    enc_bsh = jnp.transpose(enc_output, (1, 0, 2)).astype(jnp.float32)          # [B, S, H]

    flops = (2 * B * H * H * 2                 # q, folded key projection
             + 2 * B * S * H * 2               # scores, context
             + 2 * B * H * (3 * H) * 5         # GRU: ih0(x)+ih0(c)+hh0+ih1+hh1
             + 2 * B * H * out_dim * 3)        # fc_out K-split
    transcendentals = B * S + 6 * B * H        # exp + sigmoids + tanh
    bytes_accessed = 4 * (xs.size + enc_bsh.size + mask_f.size
                          + packed["w_slab"].size + packed["b_slab"].size
                          + B * out_dim + L * B * H)

    vmem = pl.BlockSpec(memory_space=pltpu.MemorySpace.VMEM)
    pred, dec_hidden = pl.pallas_call(
        _decoder_act_kernel,
        out_shape=(
            jax.ShapeDtypeStruct((B, out_dim), jnp.float32),
            jax.ShapeDtypeStruct((L, B, H), jnp.float32),
        ),
        in_specs=[vmem] * 5,
        out_specs=(vmem, vmem),
        cost_estimate=pl.CostEstimate(flops=flops,
                                      transcendentals=transcendentals,
                                      bytes_accessed=bytes_accessed),
    )(xs, enc_bsh, mask_f, packed["w_slab"], packed["b_slab"])
    return pred, dec_hidden


if __name__ == "__main__":
    B, H, S, L, VOCAB, OUT = 8, 32, 8, 2, 50, 16   # num_layers = 2 (hard-coded in kernel)
    key = jax.random.PRNGKey(0)
    keys = jax.random.split(key, 20)

    def init(k, shape, fan_in):
        bound = 1.0 / (fan_in ** 0.5)
        return jax.random.uniform(k, shape, jnp.float32, -bound, bound)

    params = {
        "embedding": jax.random.normal(keys[0], (VOCAB, H), jnp.float32),
        "wq": init(keys[1], (H, H), H),          "bq": init(keys[2], (H,), H),
        "wk": init(keys[3], (H, H), H),          "bk": init(keys[4], (H,), H),
        "wih0": init(keys[5], (3 * H, 2 * H), 2 * H),
        "whh0": init(keys[6], (3 * H, H), H),
        "bih0": init(keys[7], (3 * H,), H),      "bhh0": init(keys[8], (3 * H,), H),
        "wih1": init(keys[9], (3 * H, H), H),
        "whh1": init(keys[10], (3 * H, H), H),
        "bih1": init(keys[11], (3 * H,), H),     "bhh1": init(keys[12], (3 * H,), H),
        "wf": init(keys[13], (OUT, 3 * H), 3 * H),
        "bf": init(keys[14], (OUT,), 3 * H),
    }

    packed = prepare_decoder_act_params(params)   # done once, reused every decode step

    dec_input = jax.random.randint(keys[15], (B,), 0, VOCAB)
    s = jax.random.normal(keys[16], (L, B, H), jnp.float32)
    enc_output = jax.random.normal(keys[17], (S, B, H), jnp.float32)
    mask = jax.random.uniform(keys[18], (B, S)) > 0.2
    mask = mask.at[:, 0].set(True)   # keep behaviour well-defined (matches the reference)

    pred, dec_hidden = decoder_act_forward(dec_input, s, enc_output, mask, packed,
                                           out_dim=OUT)
    jax.block_until_ready((pred, dec_hidden))
    assert pred.shape == (B, OUT) and dec_hidden.shape == (L, B, H)
    assert bool(jnp.all(jnp.isfinite(pred))) and bool(jnp.all(jnp.isfinite(dec_hidden)))
    print("KERNEL_OK")
</pallas_src>

<mosaic_0001>
module attributes {stable_mosaic.version = 11 : i64} {
  func.func @_decoder_act_kernel(%arg0: memref<24x32xf32, #tpu.memory_space<vmem>>, %arg1: memref<8x8x32xf32, #tpu.memory_space<vmem>>, %arg2: memref<8x8xf32, #tpu.memory_space<vmem>>, %arg3: memref<320x96xf32, #tpu.memory_space<vmem>>, %arg4: memref<7x96xf32, #tpu.memory_space<vmem>>, %arg5: memref<8x16xf32, #tpu.memory_space<vmem>>, %arg6: memref<2x8x32xf32, #tpu.memory_space<vmem>>) attributes {dimension_semantics = [], scalar_prefetch = 0 : i64, scratch_operands = 0 : i64, tpu.core_type = #tpu.core_type<tc>} {
    %c0 = arith.constant 0 : index
    %c0_0 = arith.constant 0 : index
    %0 = vector.load %arg0[%c0, %c0_0] : memref<24x32xf32, #tpu.memory_space<vmem>>, vector<8x32xf32>
    %c8 = arith.constant 8 : index
    %c0_1 = arith.constant 0 : index
    %1 = vector.load %arg0[%c8, %c0_1] : memref<24x32xf32, #tpu.memory_space<vmem>>, vector<8x32xf32>
    %c16 = arith.constant 16 : index
    %c0_2 = arith.constant 0 : index
    %2 = vector.load %arg0[%c16, %c0_2] : memref<24x32xf32, #tpu.memory_space<vmem>>, vector<8x32xf32>
    %c0_3 = arith.constant 0 : index
    %c0_4 = arith.constant 0 : index
    %c0_5 = arith.constant 0 : index
    %3 = vector.load %arg1[%c0_3, %c0_4, %c0_5] : memref<8x8x32xf32, #tpu.memory_space<vmem>>, vector<8x8x32xf32>
    %c0_6 = arith.constant 0 : index
    %c0_7 = arith.constant 0 : index
    %4 = vector.load %arg2[%c0_6, %c0_7] : memref<8x8xf32, #tpu.memory_space<vmem>>, vector<8x8xf32>
    %c0_8 = arith.constant 0 : index
    %c0_9 = arith.constant 0 : index
    %5 = vector.load %arg3[%c0_8, %c0_9] : memref<320x96xf32, #tpu.memory_space<vmem>>, vector<32x32xf32>
    %c32 = arith.constant 32 : index
    %c0_10 = arith.constant 0 : index
    %6 = vector.load %arg3[%c32, %c0_10] : memref<320x96xf32, #tpu.memory_space<vmem>>, vector<32x32xf32>
    %c64 = arith.constant 64 : index
    %c0_11 = arith.constant 0 : index
    %7 = vector.load %arg3[%c64, %c0_11] : memref<320x96xf32, #tpu.memory_space<vmem>>, vector<32x96xf32>
    %c96 = arith.constant 96 : index
    %c0_12 = arith.constant 0 : index
    %8 = vector.load %arg3[%c96, %c0_12] : memref<320x96xf32, #tpu.memory_space<vmem>>, vector<32x96xf32>
    %c128 = arith.constant 128 : index
    %c0_13 = arith.constant 0 : index
    %9 = vector.load %arg3[%c128, %c0_13] : memref<320x96xf32, #tpu.memory_space<vmem>>, vector<32x96xf32>
    %c160 = arith.constant 160 : index
    %c0_14 = arith.constant 0 : index
    %10 = vector.load %arg3[%c160, %c0_14] : memref<320x96xf32, #tpu.memory_space<vmem>>, vector<32x96xf32>
    %c192 = arith.constant 192 : index
    %c0_15 = arith.constant 0 : index
    %11 = vector.load %arg3[%c192, %c0_15] : memref<320x96xf32, #tpu.memory_space<vmem>>, vector<32x96xf32>
    %c224 = arith.constant 224 : index
    %c0_16 = arith.constant 0 : index
    %12 = vector.load %arg3[%c224, %c0_16] : memref<320x96xf32, #tpu.memory_space<vmem>>, vector<32x16xf32>
    %c256 = arith.constant 256 : index
    %c0_17 = arith.constant 0 : index
    %13 = vector.load %arg3[%c256, %c0_17] : memref<320x96xf32, #tpu.memory_space<vmem>>, vector<32x16xf32>
    %c288 = arith.constant 288 : index
    %c0_18 = arith.constant 0 : index
    %14 = vector.load %arg3[%c288, %c0_18] : memref<320x96xf32, #tpu.memory_space<vmem>>, vector<32x16xf32>
    %c0_19 = arith.constant 0 : index
    %c0_20 = arith.constant 0 : index
    %15 = vector.load %arg4[%c0_19, %c0_20] : memref<7x96xf32, #tpu.memory_space<vmem>>, vector<1x32xf32>
    %c1 = arith.constant 1 : index
    %c0_21 = arith.constant 0 : index
    %16 = vector.load %arg4[%c1, %c0_21] : memref<7x96xf32, #tpu.memory_space<vmem>>, vector<1x32xf32>
    %c2 = arith.constant 2 : index
    %c0_22 = arith.constant 0 : index
    %17 = vector.load %arg4[%c2, %c0_22] : memref<7x96xf32, #tpu.memory_space<vmem>>, vector<1x96xf32>
    %c3 = arith.constant 3 : index
    %c0_23 = arith.constant 0 : index
    %18 = vector.load %arg4[%c3, %c0_23] : memref<7x96xf32, #tpu.memory_space<vmem>>, vector<1x96xf32>
    %c4 = arith.constant 4 : index
    %c0_24 = arith.constant 0 : index
    %19 = vector.load %arg4[%c4, %c0_24] : memref<7x96xf32, #tpu.memory_space<vmem>>, vector<1x96xf32>
    %c5 = arith.constant 5 : index
    %c0_25 = arith.constant 0 : index
    %20 = vector.load %arg4[%c5, %c0_25] : memref<7x96xf32, #tpu.memory_space<vmem>>, vector<1x96xf32>
    %c6 = arith.constant 6 : index
    %c0_26 = arith.constant 0 : index
    %21 = vector.load %arg4[%c6, %c0_26] : memref<7x96xf32, #tpu.memory_space<vmem>>, vector<1x16xf32>
    %22 = arith.addf %1, %2 : vector<8x32xf32>
    %cst = arith.constant 5.000000e-01 : f32
    %23 = vector.broadcast %cst : f32 to vector<8x32xf32>
    %24 = arith.mulf %23, %22 : vector<8x32xf32>
    %cst_27 = arith.constant dense<0.000000e+00> : vector<8x32xf32>
    %25 = tpu.matmul %24, %5, %cst_27 {dimension_numbers = #tpu.dot_dimension_numbers<[1], [0], [0], [1], [0, 0, 1, 1], [], []>} : vector<8x32xf32>, vector<32x32xf32>, vector<8x32xf32> -> vector<8x32xf32>
    %26 = vector.broadcast %15 : vector<1x32xf32> to vector<8x32xf32>
    %27 = arith.addf %25, %26 : vector<8x32xf32>
    %cst_28 = arith.constant dense<0.000000e+00> : vector<8x32xf32>
    %28 = tpu.matmul %27, %6, %cst_28 {dimension_numbers = #tpu.dot_dimension_numbers<[1], [0], [0], [1], [0, 0, 1, 1], [], []>} : vector<8x32xf32>, vector<32x32xf32>, vector<8x32xf32> -> vector<8x32xf32>
    %29 = vector.broadcast %16 : vector<1x32xf32> to vector<8x32xf32>
    %30 = arith.mulf %27, %29 : vector<8x32xf32>
    %cst_29 = arith.constant dense<0.000000e+00> : vector<8xf32>
    %31 = vector.multi_reduction <add>, %30, %cst_29 [1] : vector<8x32xf32> to vector<8xf32>
    %32 = vector.shape_cast %31 : vector<8xf32> to vector<8x1xf32>
    %33 = vector.shape_cast %28 : vector<8x32xf32> to vector<8x1x32xf32>
    %34 = vector.broadcast %33 : vector<8x1x32xf32> to vector<8x8x32xf32>
    %35 = arith.mulf %34, %3 : vector<8x8x32xf32>
    %cst_30 = arith.constant dense<0.000000e+00> : vector<8x8xf32>
    %36 = vector.multi_reduction <add>, %35, %cst_30 [2] : vector<8x8x32xf32> to vector<8x8xf32>
    %37 = vector.broadcast %32 : vector<8x1xf32> to vector<8x8xf32>
    %38 = arith.addf %36, %37 : vector<8x8xf32>
    %cst_31 = arith.constant 0.176776692 : f32
    %39 = vector.broadcast %cst_31 : f32 to vector<8x8xf32>
    %40 = arith.mulf %38, %39 : vector<8x8xf32>
    %cst_32 = arith.constant 5.000000e-01 : f32
    %41 = vector.broadcast %cst_32 : f32 to vector<8x8xf32>
    %42 = arith.cmpf ogt, %4, %41 : vector<8x8xf32>
    %cst_33 = arith.constant -1.000000e+30 : f32
    %43 = vector.broadcast %cst_33 : f32 to vector<8x8xf32>
    %44 = arith.select %42, %40, %43 : vector<8x8xi1>, vector<8x8xf32>
    %cst_34 = arith.constant dense<0xFF800000> : vector<8xf32>
    %45 = vector.multi_reduction <maximumf>, %44, %cst_34 [1] : vector<8x8xf32> to vector<8xf32>
    %46 = vector.shape_cast %45 : vector<8xf32> to vector<8x1xf32>
    %47 = vector.broadcast %46 : vector<8x1xf32> to vector<8x8xf32>
    %48 = arith.subf %44, %47 : vector<8x8xf32>
    %49 = math.exp %48 : vector<8x8xf32>
    %cst_35 = arith.constant dense<0.000000e+00> : vector<8xf32>
    %50 = vector.multi_reduction <add>, %49, %cst_35 [1] : vector<8x8xf32> to vector<8xf32>
    %51 = vector.shape_cast %50 : vector<8xf32> to vector<8x1xf32>
    %52 = vector.broadcast %51 : vector<8x1xf32> to vector<8x8xf32>
    %53 = arith.divf %49, %52 : vector<8x8xf32>
    %54 = vector.shape_cast %53 : vector<8x8xf32> to vector<8x8x1xf32>
    %55 = vector.broadcast %54 : vector<8x8x1xf32> to vector<8x8x32xf32>
    %56 = arith.mulf %55, %3 : vector<8x8x32xf32>
    %cst_36 = arith.constant dense<0.000000e+00> : vector<8x32xf32>
    %57 = vector.multi_reduction <add>, %56, %cst_36 [1] : vector<8x8x32xf32> to vector<8x32xf32>
    %cst_37 = arith.constant dense<0.000000e+00> : vector<8x96xf32>
    %58 = tpu.matmul %0, %7, %cst_37 {dimension_numbers = #tpu.dot_dimension_numbers<[1], [0], [0], [1], [0, 0, 1, 1], [], []>} : vector<8x32xf32>, vector<32x96xf32>, vector<8x96xf32> -> vector<8x96xf32>
    %cst_38 = arith.constant dense<0.000000e+00> : vector<8x96xf32>
    %59 = tpu.matmul %57, %8, %cst_38 {dimension_numbers = #tpu.dot_dimension_numbers<[1], [0], [0], [1], [0, 0, 1, 1], [], []>} : vector<8x32xf32>, vector<32x96xf32>, vector<8x96xf32> -> vector<8x96xf32>
    %60 = arith.addf %58, %59 : vector<8x96xf32>
    %61 = vector.broadcast %17 : vector<1x96xf32> to vector<8x96xf32>
    %62 = arith.addf %60, %61 : vector<8x96xf32>
    %cst_39 = arith.constant dense<0.000000e+00> : vector<8x96xf32>
    %63 = tpu.matmul %1, %9, %cst_39 {dimension_numbers = #tpu.dot_dimension_numbers<[1], [0], [0], [1], [0, 0, 1, 1], [], []>} : vector<8x32xf32>, vector<32x96xf32>, vector<8x96xf32> -> vector<8x96xf32>
    %64 = vector.broadcast %18 : vector<1x96xf32> to vector<8x96xf32>
    %65 = arith.addf %63, %64 : vector<8x96xf32>
    %66 = arith.addf %62, %65 : vector<8x96xf32>
    %67 = vector.extract_strided_slice %66 {offsets = [0, 0], sizes = [8, 32], strides = [1, 1]} : vector<8x96xf32> to vector<8x32xf32>
    %68 = arith.negf %67 : vector<8x32xf32>
    %69 = math.exp %68 : vector<8x32xf32>
    %cst_40 = arith.constant 1.000000e+00 : f32
    %70 = vector.broadcast %cst_40 : f32 to vector<8x32xf32>
    %71 = arith.addf %70, %69 : vector<8x32xf32>
    %72 = arith.divf %70, %71 : vector<8x32xf32>
    %73 = vector.extract_strided_slice %66 {offsets = [0, 32], sizes = [8, 32], strides = [1, 1]} : vector<8x96xf32> to vector<8x32xf32>
    %74 = arith.negf %73 : vector<8x32xf32>
    %75 = math.exp %74 : vector<8x32xf32>
    %cst_41 = arith.constant 1.000000e+00 : f32
    %76 = vector.broadcast %cst_41 : f32 to vector<8x32xf32>
    %77 = arith.addf %76, %75 : vector<8x32xf32>
    %78 = arith.divf %76, %77 : vector<8x32xf32>
    %79 = vector.extract_strided_slice %62 {offsets = [0, 64], sizes = [8, 32], strides = [1, 1]} : vector<8x96xf32> to vector<8x32xf32>
    %80 = vector.extract_strided_slice %65 {offsets = [0, 64], sizes = [8, 32], strides = [1, 1]} : vector<8x96xf32> to vector<8x32xf32>
    %81 = arith.mulf %72, %80 : vector<8x32xf32>
    %82 = arith.addf %79, %81 : vector<8x32xf32>
    %83 = math.tanh %82 : vector<8x32xf32>
    %cst_42 = arith.constant 1.000000e+00 : f32
    %84 = vector.broadcast %cst_42 : f32 to vector<8x32xf32>
    %85 = arith.subf %84, %78 : vector<8x32xf32>
    %86 = arith.mulf %85, %83 : vector<8x32xf32>
    %87 = arith.mulf %78, %1 : vector<8x32xf32>
    %88 = arith.addf %86, %87 : vector<8x32xf32>
    %cst_43 = arith.constant dense<0.000000e+00> : vector<8x96xf32>
    %89 = tpu.matmul %88, %10, %cst_43 {dimension_numbers = #tpu.dot_dimension_numbers<[1], [0], [0], [1], [0, 0, 1, 1], [], []>} : vector<8x32xf32>, vector<32x96xf32>, vector<8x96xf32> -> vector<8x96xf32>
    %90 = vector.broadcast %19 : vector<1x96xf32> to vector<8x96xf32>
    %91 = arith.addf %89, %90 : vector<8x96xf32>
    %cst_44 = arith.constant dense<0.000000e+00> : vector<8x96xf32>
    %92 = tpu.matmul %2, %11, %cst_44 {dimension_numbers = #tpu.dot_dimension_numbers<[1], [0], [0], [1], [0, 0, 1, 1], [], []>} : vector<8x32xf32>, vector<32x96xf32>, vector<8x96xf32> -> vector<8x96xf32>
    %93 = vector.broadcast %20 : vector<1x96xf32> to vector<8x96xf32>
    %94 = arith.addf %92, %93 : vector<8x96xf32>
    %95 = arith.addf %91, %94 : vector<8x96xf32>
    %96 = vector.extract_strided_slice %95 {offsets = [0, 0], sizes = [8, 32], strides = [1, 1]} : vector<8x96xf32> to vector<8x32xf32>
    %97 = arith.negf %96 : vector<8x32xf32>
    %98 = math.exp %97 : vector<8x32xf32>
    %cst_45 = arith.constant 1.000000e+00 : f32
    %99 = vector.broadcast %cst_45 : f32 to vector<8x32xf32>
    %100 = arith.addf %99, %98 : vector<8x32xf32>
    %101 = arith.divf %99, %100 : vector<8x32xf32>
    %102 = vector.extract_strided_slice %95 {offsets = [0, 32], sizes = [8, 32], strides = [1, 1]} : vector<8x96xf32> to vector<8x32xf32>
    %103 = arith.negf %102 : vector<8x32xf32>
    %104 = math.exp %103 : vector<8x32xf32>
    %cst_46 = arith.constant 1.000000e+00 : f32
    %105 = vector.broadcast %cst_46 : f32 to vector<8x32xf32>
    %106 = arith.addf %105, %104 : vector<8x32xf32>
    %107 = arith.divf %105, %106 : vector<8x32xf32>
    %108 = vector.extract_strided_slice %91 {offsets = [0, 64], sizes = [8, 32], strides = [1, 1]} : vector<8x96xf32> to vector<8x32xf32>
    %109 = vector.extract_strided_slice %94 {offsets = [0, 64], sizes = [8, 32], strides = [1, 1]} : vector<8x96xf32> to vector<8x32xf32>
    %110 = arith.mulf %101, %109 : vector<8x32xf32>
    %111 = arith.addf %108, %110 : vector<8x32xf32>
    %112 = math.tanh %111 : vector<8x32xf32>
    %cst_47 = arith.constant 1.000000e+00 : f32
    %113 = vector.broadcast %cst_47 : f32 to vector<8x32xf32>
    %114 = arith.subf %113, %107 : vector<8x32xf32>
    %115 = arith.mulf %114, %112 : vector<8x32xf32>
    %116 = arith.mulf %107, %2 : vector<8x32xf32>
    %117 = arith.addf %115, %116 : vector<8x32xf32>
    %cst_48 = arith.constant dense<0.000000e+00> : vector<8x16xf32>
    %118 = tpu.matmul %117, %12, %cst_48 {dimension_numbers = #tpu.dot_dimension_numbers<[1], [0], [0], [1], [0, 0, 1, 1], [], []>} : vector<8x32xf32>, vector<32x16xf32>, vector<8x16xf32> -> vector<8x16xf32>
    %cst_49 = arith.constant dense<0.000000e+00> : vector<8x16xf32>
    %119 = tpu.matmul %57, %13, %cst_49 {dimension_numbers = #tpu.dot_dimension_numbers<[1], [0], [0], [1], [0, 0, 1, 1], [], []>} : vector<8x32xf32>, vector<32x16xf32>, vector<8x16xf32> -> vector<8x16xf32>
    %120 = arith.addf %118, %119 : vector<8x16xf32>
    %cst_50 = arith.constant dense<0.000000e+00> : vector<8x16xf32>
    %121 = tpu.matmul %0, %14, %cst_50 {dimension_numbers = #tpu.dot_dimension_numbers<[1], [0], [0], [1], [0, 0, 1, 1], [], []>} : vector<8x32xf32>, vector<32x16xf32>, vector<8x16xf32> -> vector<8x16xf32>
    %122 = arith.addf %120, %121 : vector<8x16xf32>
    %123 = vector.broadcast %21 : vector<1x16xf32> to vector<8x16xf32>
    %124 = arith.addf %122, %123 : vector<8x16xf32>
    %c0_51 = arith.constant 0 : index
    %c0_52 = arith.constant 0 : index
    %125 = vector.load %arg5[%c0_51, %c0_52] : memref<8x16xf32, #tpu.memory_space<vmem>>, vector<8x16xf32>
    tpu.vector_store %arg5[%c0_51, %c0_52], %124 {strides = array<i32>} : memref<8x16xf32, #tpu.memory_space<vmem>>, vector<8x16xf32>,
    %c0_53 = arith.constant 0 : index
    %c0_54 = arith.constant 0 : index
    %c0_55 = arith.constant 0 : index
    %126 = vector.load %arg6[%c0_53, %c0_54, %c0_55] : memref<2x8x32xf32, #tpu.memory_space<vmem>>, vector<1x8x32xf32>
    %127 = vector.shape_cast %126 : vector<1x8x32xf32> to vector<8x32xf32>
    %128 = vector.shape_cast %88 : vector<8x32xf32> to vector<1x8x32xf32>
    tpu.vector_store %arg6[%c0_53, %c0_54, %c0_55], %128 {strides = array<i32>} : memref<2x8x32xf32, #tpu.memory_space<vmem>>, vector<1x8x32xf32>,
    %c1_56 = arith.constant 1 : index
    %c0_57 = arith.constant 0 : index
    %c0_58 = arith.constant 0 : index
    %129 = vector.load %arg6[%c1_56, %c0_57, %c0_58] : memref<2x8x32xf32, #tpu.memory_space<vmem>>, vector<1x8x32xf32>
    %130 = vector.shape_cast %129 : vector<1x8x32xf32> to vector<8x32xf32>
    %131 = vector.shape_cast %117 : vector<8x32xf32> to vector<1x8x32xf32>
    tpu.vector_store %arg6[%c1_56, %c0_57, %c0_58], %131 {strides = array<i32>} : memref<2x8x32xf32, #tpu.memory_space<vmem>>, vector<1x8x32xf32>,
    return
  }
}

</mosaic_0001>

<llo_original>
// kernel: decoder_act_forward.1
$region0: #{decoder_act_forward.1}
  #allocation0 [shape = 'u32[]', space=smem, size = 0x4, offset = 0x4, fixed_abs, tag = 'smem constant byte address 0x4 - core index']
  #allocation1 [shape = 'u32[144,128]{1,0:T(1,128)}', space=vmem, size = 0x12000, scoped, tag = 'internal scratch']
  %s0 = inlined_call_operand.vmem [shape: f32[24,32], index: 0, kind: input, shape index: {}]
  %s1 = inlined_call_operand.vmem [shape: f32[8,8,32], index: 1, kind: input, shape index: {}]
  %s2 = inlined_call_operand.vmem [shape: f32[8,8], index: 2, kind: input, shape index: {}]
  %s3 = inlined_call_operand.vmem [shape: f32[320,96], index: 3, kind: input, shape index: {}]
  %s4 = inlined_call_operand.vmem [shape: f32[7,96], index: 4, kind: input, shape index: {}]
  %s5 = inlined_call_operand.hbm [shape: f32[8,16], index: 5, kind: output, shape index: {0}]
  %s6 = inlined_call_operand.hbm [shape: f32[2,8,32], index: 6, kind: output, shape index: {1}]
  %7 = xla_tuple %s5, %s6
  %s8 = sld [smem:[#allocation0]]
  $region38: #{decoder_act_forward.1} parent=0
    _
  %s10 = ssub.s32 1, %s8
  %s11 = scalar_select 0, %s10, %s8
  $region1: #{decoder_act_forward.1} parent=0
    #allocation2 [shape = 'u8[4096]{0}', space=vmem, size = 0x1000, scoped, tag = 'output window, operand 0, single buffered']
    #allocation3 [shape = 's32[1]{0}', space=sflag, size = 0x4, scoped, tag = 'scoped memory for decoder_act_forward.1']
    #allocation4 [shape = 'u8[8192]{0}', space=vmem, size = 0x2000, scoped, tag = 'output window, operand 1, single buffered']
    #allocation5 [shape = 's32[1]{0}', space=sflag, size = 0x4, scoped, tag = 'scoped memory for decoder_act_forward.1']
    %12 = vsyncpa [#allocation3], 0
    %13 = vsyncpa [#allocation5], 0
    // Predicated region
    $region2: #{decoder_act_forward.1} parent=1 // pred_check
      _
    $region3: #{decoder_act_forward.1} parent=1 // pred_check_branch
      %15 = sbr.rel (0) target = $region5
    $region4: #{decoder_act_forward.1} parent=1 // pred_region
      _
    $region5: #{decoder_act_forward.1} parent=1 // pred_fallthru
      _
    // Predicated region
    $region6: #{decoder_act_forward.1} parent=1 // pred_check
      _
    $region7: #{decoder_act_forward.1} parent=1 // pred_check_branch
      %17 = sbr.rel (0) target = $region9
    $region8: #{decoder_act_forward.1} parent=1 // pred_region
      _
    $region9: #{decoder_act_forward.1} parent=1 // pred_fallthru
      _
    // Predicated region
    $region10: #{decoder_act_forward.1} parent=1 // pred_check
      _
    $region11: #{decoder_act_forward.1} parent=1 // pred_check_branch
      %19 = sbr.rel (0) target = $region13
    $region12: #{decoder_act_forward.1} parent=1 // pred_region
      _
    $region13: #{decoder_act_forward.1} parent=1 // pred_fallthru
      _
    // Predicated region
    $region14: #{decoder_act_forward.1} parent=1 // pred_check
      _
    $region15: #{decoder_act_forward.1} parent=1 // pred_check_branch
      %21 = sbr.rel (0) target = $region17
    $region16: #{decoder_act_forward.1} parent=1 // pred_region
      _
    $region17: #{decoder_act_forward.1} parent=1 // pred_fallthru
      _
    // Predicated region
    $region18: #{decoder_act_forward.1} parent=1 // pred_check
      _
    $region19: #{decoder_act_forward.1} parent=1 // pred_check_branch
      %23 = sbr.rel (0) target = $region21
    $region20: #{decoder_act_forward.1} parent=1 // pred_region
      _
    $region21: #{decoder_act_forward.1} parent=1 // pred_fallthru
      _
    %v24 = vld [vmem:[%s0] sm:$0xff]
    %v25 = vld [vmem:[%s0 + $0x8] sm:$0xff]
    %v26 = vld [vmem:[%s0 + $0x10] sm:$0xff]
    %v27 = vld [vmem:[%s1] sm:$0xff]
    %v28 = vld [vmem:[%s1 + $0x8] sm:$0xff]
    %v29 = vld [vmem:[%s1 + $0x10] sm:$0xff]
    %v30 = vld [vmem:[%s1 + $0x18] sm:$0xff]
    %v31 = vld [vmem:[%s1 + $0x20] sm:$0xff]
    %v32 = vld [vmem:[%s1 + $0x28] sm:$0xff]
    %v33 = vld [vmem:[%s1 + $0x30] sm:$0xff]
    %v34 = vld [vmem:[%s1 + $0x38] sm:$0xff]
    %v35 = vld [vmem:[%s2] sm:$0xff]
    %v36 = vld [vmem:[%s3] sm:$0xff]
    %v37 = vld [vmem:[%s3 + $0x8] sm:$0xff]
    %v38 = vld [vmem:[%s3 + $0x10] sm:$0xff]
    %v39 = vld [vmem:[%s3 + $0x18] sm:$0xff]
    %v40 = vld [vmem:[%s3 + $0x20] sm:$0xff]
    %v41 = vld [vmem:[%s3 + $0x28] sm:$0xff]
    %v42 = vld [vmem:[%s3 + $0x30] sm:$0xff]
    %v43 = vld [vmem:[%s3 + $0x38] sm:$0xff]
    %v44 = vld [vmem:[%s3 + $0x40] sm:$0xff]
    %v45 = vld [vmem:[%s3 + $0x48] sm:$0xff]
    %v46 = vld [vmem:[%s3 + $0x50] sm:$0xff]
    %v47 = vld [vmem:[%s3 + $0x58] sm:$0xff]
    %v48 = vld [vmem:[%s3 + $0x60] sm:$0xff]
    %v49 = vld [vmem:[%s3 + $0x68] sm:$0xff]
    %v50 = vld [vmem:[%s3 + $0x70] sm:$0xff]
    %v51 = vld [vmem:[%s3 + $0x78] sm:$0xff]
    %v52 = vld [vmem:[%s3 + $0x80] sm:$0xff]
    %v53 = vld [vmem:[%s3 + $0x88] sm:$0xff]
    %v54 = vld [vmem:[%s3 + $0x90] sm:$0xff]
    %v55 = vld [vmem:[%s3 + $0x98] sm:$0xff]
    %v56 = vld [vmem:[%s3 + $0xa0] sm:$0xff]
    %v57 = vld [vmem:[%s3 + $0xa8] sm:$0xff]
    %v58 = vld [vmem:[%s3 + $0xb0] sm:$0xff]
    %v59 = vld [vmem:[%s3 + $0xb8] sm:$0xff]
    %v60 = vld [vmem:[%s3 + $0xc0] sm:$0xff]
    %v61 = vld [vmem:[%s3 + $0xc8] sm:$0xff]
    %v62 = vld [vmem:[%s3 + $0xd0] sm:$0xff]
    %v63 = vld [vmem:[%s3 + $0xd8] sm:$0xff]
    %v64 = vld [vmem:[%s3 + $0xe0] sm:$0xff]
    %v65 = vld [vmem:[%s3 + $0xe8] sm:$0xff]
    %v66 = vld [vmem:[%s3 + $0xf0] sm:$0xff]
    %v67 = vld [vmem:[%s3 + $0xf8] sm:$0xff]
    %v68 = vld [vmem:[%s3 + $0x100] sm:$0xff]
    %v69 = vld [vmem:[%s3 + $0x108] sm:$0xff]
    %v70 = vld [vmem:[%s3 + $0x110] sm:$0xff]
    %v71 = vld [vmem:[%s3 + $0x118] sm:$0xff]
    %v72 = vld [vmem:[%s3 + $0x120] sm:$0xff]
    %v73 = vld [vmem:[%s3 + $0x128] sm:$0xff]
    %v74 = vld [vmem:[%s3 + $0x130] sm:$0xff]
    %v75 = vld [vmem:[%s3 + $0x138] sm:$0xff]
    %v76 = vld [vmem:[%s4] sm:$0x1]
    %v77 = vld [vmem:[%s4 + $0x1] sm:$0x1]
    %v78 = vld [vmem:[%s4 + $0x2] sm:$0x1]
    %v79 = vld [vmem:[%s4 + $0x3] sm:$0x1]
    %v80 = vld [vmem:[%s4 + $0x4] sm:$0x1]
    %v81 = vld [vmem:[%s4 + $0x5] sm:$0x1]
    %v82 = vld [vmem:[%s4 + $0x6] sm:$0x1]
    %v83 = vadd.f32 %v25, %v26
    %v84 = vmul.f32 %v83, 0.5
    %v85 = vlaneseq
    %v86 = vshrl.u32 %v85, 7
    %v87 = vsub.s32 0, %v86
    %v88 = vrot.slane %v76, %v87
    %vm89 = vcmask 261120
    %v91 = vsel %vm89, %v84, 0
    %93 = vmatprep.subr.mxu0 0.0
    %94 = vmatpush1.msra.mxu0 %v36
    %95 = vmatprep.subr.mxu0 0.0
    %96 = vmatpush1.msra.mxu0 %v37
    %97 = vmatprep.subr.mxu0 0.0
    %98 = vmatpush1.msra.mxu0 %v38
    %99 = vmatprep.subr.mxu0 0.0
    %100 = vmatpush1.msra.mxu0 %v39
    %101 = vmatprep.subr.mxu0 0.0
    %102 = vmatpush1.msra.mxu0 0.0
    %103 = vmatprep.subr.mxu0 0.0
    %104 = vmatpush1.msra.mxu0 0.0
    %105 = vmatprep.subr.mxu0 0.0
    %106 = vmatpush1.msra.mxu0 0.0
    %107 = vmatprep.subr.mxu0 0.0
    %108 = vmatpush1.msra.mxu0 0.0
    %109 = vmatprep.subr.mxu0 0.0
    %110 = vmatpush1.msra.mxu0 0.0
    %111 = vmatprep.subr.mxu0 0.0
    %112 = vmatpush1.msra.mxu0 0.0
    %113 = vmatprep.subr.mxu0 0.0
    %114 = vmatpush1.msra.mxu0 0.0
    %115 = vmatprep.subr.mxu0 0.0
    %116 = vmatpush1.msra.mxu0 0.0
    %117 = vmatprep.subr.mxu0 0.0
    %118 = vmatpush1.msra.mxu0 0.0
    %119 = vmatprep.subr.mxu0 0.0
    %120 = vmatpush1.msra.mxu0 0.0
    %121 = vmatprep.subr.mxu0 0.0
    %122 = vmatpush1.msra.mxu0 0.0
    %123 = vmatprep.subr.mxu0 0.0
    %124 = vmatpush1.msra.mxu0 0.0
    %125 = vmatprep.subr.mxu0 0.0
    %126 = vmatpush1.msra.mxu0 0.0
    %127 = vmatprep.subr.mxu0 0.0
    %128 = vmatpush1.msra.mxu0 0.0
    %129 = vmatprep.subr.mxu0 0.0
    %130 = vmatpush1.msra.mxu0 0.0
    %131 = vmatprep.subr.mxu0 0.0
    %132 = vmatpush1.msra.mxu0 0.0
    %133 = vmatprep.subr.mxu0 0.0
    %134 = vmatpush1.msra.mxu0 0.0
    %135 = vmatprep.subr.mxu0 0.0
    %136 = vmatpush1.msra.mxu0 0.0
    %137 = vmatprep.subr.mxu0 0.0
    %138 = vmatpush1.msra.mxu0 0.0
    %139 = vmatprep.subr.mxu0 0.0
    %140 = vmatpush1.msra.mxu0 0.0
    %141 = vmatprep.subr.mxu0 0.0
    %142 = vmatpush1.msra.mxu0 0.0
    %143 = vmatprep.subr.mxu0 0.0
    %144 = vmatpush1.msra.mxu0 0.0
    %145 = vmatprep.subr.mxu0 0.0
    %146 = vmatpush1.msra.mxu0 0.0
    %147 = vmatprep.subr.mxu0 0.0
    %148 = vmatpush1.msra.mxu0 0.0
    %149 = vmatprep.subr.mxu0 0.0
    %150 = vmatpush1.msra.mxu0 0.0
    %151 = vmatprep.subr.mxu0 0.0
    %152 = vmatpush1.msra.mxu0 0.0
    %153 = vmatprep.subr.mxu0 0.0
    %154 = vmatpush1.msra.mxu0 0.0
    %155 = vmatprep.subr.mxu0 0.0
    %156 = vmatpush1.msra.mxu0 0.0
    %157 = vmatprep.mubr.f32.mxu0 0.0
    %158 = vmatmul.mubr.f32.gmra.mrb[0].mxu0 %v91
    %v159 = vpop.f32.mrb[0].mxu0
    %v160 = vadd.f32 %v88, %v159
    %v161 = vpop.f32.mrb[0].mxu0
    %162 = vdwg.mxu0
    %v164 = vsel %vm89, %v160, 0
    %166 = vmatprep.subr.mxu0 0.0
    %167 = vmatpush1.msra.mxu0 %v40
    %168 = vmatprep.subr.mxu0 0.0
    %169 = vmatpush1.msra.mxu0 %v41
    %170 = vmatprep.subr.mxu0 0.0
    %171 = vmatpush1.msra.mxu0 %v42
    %172 = vmatprep.subr.mxu0 0.0
    %173 = vmatpush1.msra.mxu0 %v43
    %174 = vmatprep.subr.mxu0 0.0
    %175 = vmatpush1.msra.mxu0 0.0
    %176 = vmatprep.subr.mxu0 0.0
    %177 = vmatpush1.msra.mxu0 0.0
    %178 = vmatprep.subr.mxu0 0.0
    %179 = vmatpush1.msra.mxu0 0.0
    %180 = vmatprep.subr.mxu0 0.0
    %181 = vmatpush1.msra.mxu0 0.0
    %182 = vmatprep.subr.mxu0 0.0
    %183 = vmatpush1.msra.mxu0 0.0
    %184 = vmatprep.subr.mxu0 0.0
    %185 = vmatpush1.msra.mxu0 0.0
    %186 = vmatprep.subr.mxu0 0.0
    %187 = vmatpush1.msra.mxu0 0.0
    %188 = vmatprep.subr.mxu0 0.0
    %189 = vmatpush1.msra.mxu0 0.0
    %190 = vmatprep.subr.mxu0 0.0
    %191 = vmatpush1.msra.mxu0 0.0
    %192 = vmatprep.subr.mxu0 0.0
    %193 = vmatpush1.msra.mxu0 0.0
    %194 = vmatprep.subr.mxu0 0.0
    %195 = vmatpush1.msra.mxu0 0.0
    %196 = vmatprep.subr.mxu0 0.0
    %197 = vmatpush1.msra.mxu0 0.0
    %198 = vmatprep.subr.mxu0 0.0
    %199 = vmatpush1.msra.mxu0 0.0
    %200 = vmatprep.subr.mxu0 0.0
    %201 = vmatpush1.msra.mxu0 0.0
    %202 = vmatprep.subr.mxu0 0.0
    %203 = vmatpush1.msra.mxu0 0.0
    %204 = vmatprep.subr.mxu0 0.0
    %205 = vmatpush1.msra.mxu0 0.0
    %206 = vmatprep.subr.mxu0 0.0
    %207 = vmatpush1.msra.mxu0 0.0
    %208 = vmatprep.subr.mxu0 0.0
    %209 = vmatpush1.msra.mxu0 0.0
    %210 = vmatprep.subr.mxu0 0.0
    %211 = vmatpush1.msra.mxu0 0.0
    %212 = vmatprep.subr.mxu0 0.0
    %213 = vmatpush1.msra.mxu0 0.0
    %214 = vmatprep.subr.mxu0 0.0
    %215 = vmatpush1.msra.mxu0 0.0
    %216 = vmatprep.subr.mxu0 0.0
    %217 = vmatpush1.msra.mxu0 0.0
    %218 = vmatprep.subr.mxu0 0.0
    %219 = vmatpush1.msra.mxu0 0.0
    %220 = vmatprep.subr.mxu0 0.0
    %221 = vmatpush1.msra.mxu0 0.0
    %222 = vmatprep.subr.mxu0 0.0
    %223 = vmatpush1.msra.mxu0 0.0
    %224 = vmatprep.subr.mxu0 0.0
    %225 = vmatpush1.msra.mxu0 0.0
    %226 = vmatprep.subr.mxu0 0.0
    %227 = vmatpush1.msra.mxu0 0.0
    %228 = vmatprep.subr.mxu0 0.0
    %229 = vmatpush1.msra.mxu0 0.0
    %230 = vmatprep.mubr.f32.mxu0 0.0
    %231 = vmatmul.mubr.f32.gmra.mrb[0].mxu0 %v164
    %v232 = vpop.f32.mrb[0].mxu0
    %v233 = vadd.f32 0.0, %v232
    %v234 = vpop.f32.mrb[0].mxu0
    %235 = vdwg.mxu0
    %v236 = vlaneseq
    %v237 = vshrl.u32 %v236, 7
    %v238 = vsub.s32 0, %v237
    %v239 = vrot.slane %v77, %v238
    %v240 = vmul.f32 %v160, %v239
    %v241 = vsel %vm89, %v240, 0.0
    %242 = vadd.xlane.f32.xlu0 %v241
    %v243 = vpop.xlane.xlu0 %242
    %v245 = vcombine.high %v233, %v233
    %v247 = vunpack.c.l.s4 1966171168
    %v248 = vunpack.c.0.s8 %v247
    %v249 = vlaneseq
    %v250 = vshrl.u32 %v249, 7
    %v251 = vsub.s32 %v248, %v250
    %v252 = vrot.slane %v233, %v251
    %v254 = vunpack.c.l.s4 1966171168
    %v255 = vunpack.c.0.s8 %v254
    %v256 = vlaneseq
    %v257 = vshrl.u32 %v256, 7
    %v258 = vsub.s32 %v255, %v257
    %v259 = vrot.slane %v245, %v258
    %v260 = vcombine.high %v252, %v252
    %v261 = vcombine.high %v259, %v259
    %v263 = vunpack.c.l.s4 1966171168
    %v264 = vunpack.c.0.s8 %v263
    %v265 = vlaneseq
    %v266 = vshrl.u32 %v265, 7
    %v267 = vsub.s32 %v264, %v266
    %v268 = vrot.slane %v252, %v267
    %v270 = vunpack.c.l.s4 1966171168
    %v271 = vunpack.c.0.s8 %v270
    %v272 = vlaneseq
    %v273 = vshrl.u32 %v272, 7
    %v274 = vsub.s32 %v271, %v273
    %v275 = vrot.slane %v259, %v274
    %v277 = vunpack.c.l.s4 1966171168
    %v278 = vunpack.c.0.s8 %v277
    %v279 = vlaneseq
    %v280 = vshrl.u32 %v279, 7
    %v281 = vsub.s32 %v278, %v280
    %v282 = vrot.slane %v260, %v281
    %v284 = vunpack.c.l.s4 1966171168
    %v285 = vunpack.c.0.s8 %v284
    %v286 = vlaneseq
    %v287 = vshrl.u32 %v286, 7
    %v288 = vsub.s32 %v285, %v287
    %v289 = vrot.slane %v261, %v288
    %v290 = vcombine.high %v268, %v268
    %v291 = vcombine.high %v275, %v275
    %v292 = vcombine.high %v282, %v282
    %v293 = vcombine.high %v289, %v289
    %v294 = vlaneseq
    %v295 = vshrl.u32 %v294, 7
    %v296 = vsub.s32 0, %v295
    %v297 = vrot.slane %v268, %v296
    %v298 = vlaneseq
    %v299 = vshrl.u32 %v298, 7
    %v300 = vsub.s32 0, %v299
    %v301 = vrot.slane %v282, %v300
    %v302 = vlaneseq
    %v303 = vshrl.u32 %v302, 7
    %v304 = vsub.s32 0, %v303
    %v305 = vrot.slane %v290, %v304
    %v306 = vlaneseq
    %v307 = vshrl.u32 %v306, 7
    %v308 = vsub.s32 0, %v307
    %v309 = vrot.slane %v292, %v308
    %v310 = vlaneseq
    %v311 = vshrl.u32 %v310, 7
    %v312 = vsub.s32 0, %v311
    %v313 = vrot.slane %v275, %v312
    %v314 = vlaneseq
    %v315 = vshrl.u32 %v314, 7
    %v316 = vsub.s32 0, %v315
    %v317 = vrot.slane %v289, %v316
    %v318 = vlaneseq
    %v319 = vshrl.u32 %v318, 7
    %v320 = vsub.s32 0, %v319
    %v321 = vrot.slane %v291, %v320
    %v322 = vlaneseq
    %v323 = vshrl.u32 %v322, 7
    %v324 = vsub.s32 0, %v323
    %v325 = vrot.slane %v293, %v324
    %v334 = vmul.f32 %v297, %v27
    %v335 = vmul.f32 %v301, %v28
    %v336 = vmul.f32 %v305, %v29
    %v337 = vmul.f32 %v309, %v30
    %v338 = vmul.f32 %v313, %v31
    %v339 = vmul.f32 %v317, %v32
    %v340 = vmul.f32 %v321, %v33
    %v341 = vmul.f32 %v325, %v34
    %v342 = vsel %vm89, %v334, 0.0
    %343 = vadd.xlane.f32.xlu0 %v342
    %v344 = vpop.xlane.xlu0 %343
    %v345 = vsel %vm89, %v335, 0.0
    %346 = vadd.xlane.f32.xlu0 %v345
    %v347 = vpop.xlane.xlu0 %346
    %v348 = vsel %vm89, %v336, 0.0
    %349 = vadd.xlane.f32.xlu0 %v348
    %v350 = vpop.xlane.xlu0 %349
    %v351 = vsel %vm89, %v337, 0.0
    %352 = vadd.xlane.f32.xlu0 %v351
    %v353 = vpop.xlane.xlu0 %352
    %v354 = vsel %vm89, %v338, 0.0
    %355 = vadd.xlane.f32.xlu0 %v354
    %v356 = vpop.xlane.xlu0 %355
    %v357 = vsel %vm89, %v339, 0.0
    %358 = vadd.xlane.f32.xlu0 %v357
    %v359 = vpop.xlane.xlu0 %358
    %v360 = vsel %vm89, %v340, 0.0
    %361 = vadd.xlane.f32.xlu0 %v360
    %v362 = vpop.xlane.xlu0 %361
    %v363 = vsel %vm89, %v341, 0.0
    %364 = vadd.xlane.f32.xlu0 %v363
    %v365 = vpop.xlane.xlu0 %364
    %v367 = vlaneseq
    %v368 = vshrl.u32 %v367, 7
    %v369 = vsub.s32 0, %v368
    %v370 = vrot.slane %v243, %v369
    %v371 = vlaneseq
    %v372 = vshrl.u32 %v371, 7
    %v373 = vsub.s32 1, %v372
    %v374 = vrot.slane %v243, %v373
    %v375 = vlaneseq
    %v376 = vshrl.u32 %v375, 7
    %v377 = vsub.s32 2, %v376
    %v378 = vrot.slane %v243, %v377
    %v379 = vlaneseq
    %v380 = vshrl.u32 %v379, 7
    %v381 = vsub.s32 3, %v380
    %v382 = vrot.slane %v243, %v381
    %v383 = vlaneseq
    %v384 = vshrl.u32 %v383, 7
    %v385 = vsub.s32 4, %v384
    %v386 = vrot.slane %v243, %v385
    %v387 = vlaneseq
    %v388 = vshrl.u32 %v387, 7
    %v389 = vsub.s32 5, %v388
    %v390 = vrot.slane %v243, %v389
    %v391 = vlaneseq
    %v392 = vshrl.u32 %v391, 7
    %v393 = vsub.s32 6, %v392
    %v394 = vrot.slane %v243, %v393
    %v395 = vlaneseq
    %v396 = vshrl.u32 %v395, 7
    %v397 = vsub.s32 7, %v396
    %v398 = vrot.slane %v243, %v397
    %v407 = vadd.f32 %v344, %v370
    %v408 = vadd.f32 %v347, %v374
    %v409 = vadd.f32 %v350, %v378
    %v410 = vadd.f32 %v353, %v382
    %v411 = vadd.f32 %v356, %v386
    %v412 = vadd.f32 %v359, %v390
    %v413 = vadd.f32 %v362, %v394
    %v414 = vadd.f32 %v365, %v398
    %v415 = vmul.f32 %v407, 0.17677669
    %v416 = vmul.f32 %v408, 0.17677669
    %v417 = vmul.f32 %v409, 0.17677669
    %v418 = vmul.f32 %v410, 0.17677669
    %v419 = vmul.f32 %v411, 0.17677669
    %v420 = vmul.f32 %v412, 0.17677669
    %v421 = vmul.f32 %v413, 0.17677669
    %v422 = vmul.f32 %v414, 0.17677669
    %vm423 = vcmp.gt.f32.partialorder %v35, 0.5
    %432 = vset.pattern.permute.xlu0 0
    %433 = vperm.xlu0 %432, %v415
    %v434 = vpop.permute.xlu0 %433
    %435 = vset.pattern.permute.xlu0 0
    %436 = vperm.xlu0 %435, %v416
    %v437 = vpop.permute.xlu0 %436
    %438 = vset.pattern.permute.xlu0 0
    %439 = vperm.xlu0 %438, %v417
    %v440 = vpop.permute.xlu0 %439
    %441 = vset.pattern.permute.xlu0 0
    %442 = vperm.xlu0 %441, %v418
    %v443 = vpop.permute.xlu0 %442
    %444 = vset.pattern.permute.xlu0 0
    %445 = vperm.xlu0 %444, %v419
    %v446 = vpop.permute.xlu0 %445
    %447 = vset.pattern.permute.xlu0 0
    %448 = vperm.xlu0 %447, %v420
    %v449 = vpop.permute.xlu0 %448
    %450 = vset.pattern.permute.xlu0 0
    %451 = vperm.xlu0 %450, %v421
    %v452 = vpop.permute.xlu0 %451
    %453 = vset.pattern.permute.xlu0 0
    %454 = vperm.xlu0 %453, %v422
    %v455 = vpop.permute.xlu0 %454
    %v456 = vlaneseq
    %v457 = vand.u32 %v456, 127
    %v458 = vlaneseq
    %v459 = vshrl.u32 %v458, 7
    %v460 = vsub.s32 %v457, %v459
    %v461 = vrot.slane %v434, %v460
    %v462 = vlaneseq
    %v463 = vshrl.u32 %v462, 7
    %v464 = vsub.s32 %v457, %v463
    %v465 = vrot.slane %v437, %v464
    %v466 = vlaneseq
    %v467 = vshrl.u32 %v466, 7
    %v468 = vsub.s32 %v457, %v467
    %v469 = vrot.slane %v440, %v468
    %v470 = vlaneseq
    %v471 = vshrl.u32 %v470, 7
    %v472 = vsub.s32 %v457, %v471
    %v473 = vrot.slane %v443, %v472
    %v474 = vlaneseq
    %v475 = vshrl.u32 %v474, 7
    %v476 = vsub.s32 %v457, %v475
    %v477 = vrot.slane %v446, %v476
    %v478 = vlaneseq
    %v479 = vshrl.u32 %v478, 7
    %v480 = vsub.s32 %v457, %v479
    %v481 = vrot.slane %v449, %v480
    %v482 = vlaneseq
    %v483 = vshrl.u32 %v482, 7
    %v484 = vsub.s32 %v457, %v483
    %v485 = vrot.slane %v452, %v484
    %v486 = vlaneseq
    %v487 = vshrl.u32 %v486, 7
    %v488 = vsub.s32 %v457, %v487
    %v489 = vrot.slane %v455, %v488
    %vm490 = vcmask 1041409
    %v491 = vsel %vm490, %v465, %v461
    %vm492 = vcmask 1042434
    %v493 = vsel %vm492, %v469, %v491
    %vm494 = vcmask 1043459
    %v495 = vsel %vm494, %v473, %v493
    %vm496 = vcmask 1044484
    %v497 = vsel %vm496, %v477, %v495
    %vm498 = vcmask 1045509
    %v499 = vsel %vm498, %v481, %v497
    %vm500 = vcmask 1046534
    %v501 = vsel %vm500, %v485, %v499
    %vm502 = vcmask 1047559
    %v503 = vsel %vm502, %v489, %v501
    %v505 = vsel %vm423, %v503, -1e+30
    %vm506 = vcmask 64512
    %v507 = vsel %vm506, %v505, -inf
    %508 = vmax.xlane.f32.xlu0 %v507
    %v509 = vpop.xlane.xlu0 %508
    %v510 = vsub.f32 %v505, %v509
    %v511 = vmul.f32 %v510, 1.442695
    %v512 = vpow.pop %v511
    %v513 = vsel %vm506, %v512, 0.0
    %514 = vadd.xlane.f32.xlu0 %v513
    %v515 = vpop.xlane.xlu0 %514
    %v516 = vrcp.pop %v515
    %v517 = vmul.f32 %v512, %v516
    %v518 = vlaneseq
    %v519 = vshrl.u32 %v518, 7
    %v520 = vsub.s32 0, %v519
    %v521 = vrot.slane %v517, %v520
    %523 = vbcast.lane.b32.xlu0 %v521, 256
    %v524 = vpop.permute.xlu0 %523
    %v525 = vlaneseq
    %v526 = vshrl.u32 %v525, 7
    %v527 = vsub.s32 1, %v526
    %v528 = vrot.slane %v517, %v527
    %530 = vbcast.lane.b32.xlu0 %v528, 256
    %v531 = vpop.permute.xlu0 %530
    %v532 = vlaneseq
    %v533 = vshrl.u32 %v532, 7
    %v534 = vsub.s32 2, %v533
    %v535 = vrot.slane %v517, %v534
    %537 = vbcast.lane.b32.xlu0 %v535, 256
    %v538 = vpop.permute.xlu0 %537
    %v539 = vlaneseq
    %v540 = vshrl.u32 %v539, 7
    %v541 = vsub.s32 3, %v540
    %v542 = vrot.slane %v517, %v541
    %544 = vbcast.lane.b32.xlu0 %v542, 256
    %v545 = vpop.permute.xlu0 %544
    %v546 = vlaneseq
    %v547 = vshrl.u32 %v546, 7
    %v548 = vsub.s32 4, %v547
    %v549 = vrot.slane %v517, %v548
    %551 = vbcast.lane.b32.xlu0 %v549, 256
    %v552 = vpop.permute.xlu0 %551
    %v553 = vlaneseq
    %v554 = vshrl.u32 %v553, 7
    %v555 = vsub.s32 5, %v554
    %v556 = vrot.slane %v517, %v555
    %558 = vbcast.lane.b32.xlu0 %v556, 256
    %v559 = vpop.permute.xlu0 %558
    %v560 = vlaneseq
    %v561 = vshrl.u32 %v560, 7
    %v562 = vsub.s32 6, %v561
    %v563 = vrot.slane %v517, %v562
    %565 = vbcast.lane.b32.xlu0 %v563, 256
    %v566 = vpop.permute.xlu0 %565
    %v567 = vlaneseq
    %v568 = vshrl.u32 %v567, 7
    %v569 = vsub.s32 7, %v568
    %v570 = vrot.slane %v517, %v569
    %572 = vbcast.lane.b32.xlu0 %v570, 256
    %v573 = vpop.permute.xlu0 %572
    %v574 = vmul.f32 %v524, %v27
    %v575 = vmul.f32 %v531, %v28
    %v576 = vmul.f32 %v538, %v29
    %v577 = vmul.f32 %v545, %v30
    %v578 = vmul.f32 %v552, %v31
    %v579 = vmul.f32 %v559, %v32
    %v580 = vmul.f32 %v566, %v33
    %v581 = vmul.f32 %v573, %v34
    %v582 = vsel %vm89, %v574, 0.0
    %v583 = vrot.slane %v582, 4
    %v584 = vadd.f32 %v582, %v583
    %v585 = vrot.slane %v584, 2
    %v586 = vadd.f32 %v584, %v585
    %v587 = vrot.slane %v586, 1
    %v588 = vadd.f32 %v586, %v587
    %v589 = vsel %vm89, %v575, 0.0
    %v590 = vrot.slane %v589, 4
    %v591 = vadd.f32 %v589, %v590
    %v592 = vrot.slane %v591, 2
    %v593 = vadd.f32 %v591, %v592
    %v594 = vrot.slane %v593, 1
    %v595 = vadd.f32 %v593, %v594
    %v596 = vsel %vm89, %v576, 0.0
    %v597 = vrot.slane %v596, 4
    %v598 = vadd.f32 %v596, %v597
    %v599 = vrot.slane %v598, 2
    %v600 = vadd.f32 %v598, %v599
    %v601 = vrot.slane %v600, 1
    %v602 = vadd.f32 %v600, %v601
    %v603 = vsel %vm89, %v577, 0.0
    %v604 = vrot.slane %v603, 4
    %v605 = vadd.f32 %v603, %v604
    %v606 = vrot.slane %v605, 2
    %v607 = vadd.f32 %v605, %v606
    %v608 = vrot.slane %v607, 1
    %v609 = vadd.f32 %v607, %v608
    %v610 = vsel %vm89, %v578, 0.0
    %v611 = vrot.slane %v610, 4
    %v612 = vadd.f32 %v610, %v611
    %v613 = vrot.slane %v612, 2
    %v614 = vadd.f32 %v612, %v613
    %v615 = vrot.slane %v614, 1
    %v616 = vadd.f32 %v614, %v615
    %v617 = vsel %vm89, %v579, 0.0
    %v618 = vrot.slane %v617, 4
    %v619 = vadd.f32 %v617, %v618
    %v620 = vrot.slane %v619, 2
    %v621 = vadd.f32 %v619, %v620
    %v622 = vrot.slane %v621, 1
    %v623 = vadd.f32 %v621, %v622
    %v624 = vsel %vm89, %v580, 0.0
    %v625 = vrot.slane %v624, 4
    %v626 = vadd.f32 %v624, %v625
    %v627 = vrot.slane %v626, 2
    %v628 = vadd.f32 %v626, %v627
    %v629 = vrot.slane %v628, 1
    %v630 = vadd.f32 %v628, %v629
    %v631 = vsel %vm89, %v581, 0.0
    %v632 = vrot.slane %v631, 4
    %v633 = vadd.f32 %v631, %v632
    %v634 = vrot.slane %v633, 2
    %v635 = vadd.f32 %v633, %v634
    %v636 = vrot.slane %v635, 1
    %v637 = vadd.f32 %v635, %v636
    %v646 = vsel %vm490, %v595, %v588
    %v647 = vsel %vm492, %v602, %v646
    %v648 = vsel %vm494, %v609, %v647
    %v649 = vsel %vm496, %v616, %v648
    %v650 = vsel %vm498, %v623, %v649
    %v651 = vsel %vm500, %v630, %v650
    %v652 = vsel %vm502, %v637, %v651
    %v653 = vsel %vm89, %v652, 0
    %655 = vmatprep.subr.mxu0 0.0
    %656 = vmatpush1.msra.mxu0 %v48
    %657 = vmatprep.subr.mxu0 0.0
    %658 = vmatpush1.msra.mxu0 %v49
    %659 = vmatprep.subr.mxu0 0.0
    %660 = vmatpush1.msra.mxu0 %v50
    %661 = vmatprep.subr.mxu0 0.0
    %662 = vmatpush1.msra.mxu0 %v51
    %663 = vmatprep.subr.mxu0 0.0
    %664 = vmatpush1.msra.mxu0 0.0
    %665 = vmatprep.subr.mxu0 0.0
    %666 = vmatpush1.msra.mxu0 0.0
    %667 = vmatprep.subr.mxu0 0.0
    %668 = vmatpush1.msra.mxu0 0.0
    %669 = vmatprep.subr.mxu0 0.0
    %670 = vmatpush1.msra.mxu0 0.0
    %671 = vmatprep.subr.mxu0 0.0
    %672 = vmatpush1.msra.mxu0 0.0
    %673 = vmatprep.subr.mxu0 0.0
    %674 = vmatpush1.msra.mxu0 0.0
    %675 = vmatprep.subr.mxu0 0.0
    %676 = vmatpush1.msra.mxu0 0.0
    %677 = vmatprep.subr.mxu0 0.0
    %678 = vmatpush1.msra.mxu0 0.0
    %679 = vmatprep.subr.mxu0 0.0
    %680 = vmatpush1.msra.mxu0 0.0
    %681 = vmatprep.subr.mxu0 0.0
    %682 = vmatpush1.msra.mxu0 0.0
    %683 = vmatprep.subr.mxu0 0.0
    %684 = vmatpush1.msra.mxu0 0.0
    %685 = vmatprep.subr.mxu0 0.0
    %686 = vmatpush1.msra.mxu0 0.0
    %687 = vmatprep.subr.mxu0 0.0
    %688 = vmatpush1.msra.mxu0 0.0
    %689 = vmatprep.subr.mxu0 0.0
    %690 = vmatpush1.msra.mxu0 0.0
    %691 = vmatprep.subr.mxu0 0.0
    %692 = vmatpush1.msra.mxu0 0.0
    %693 = vmatprep.subr.mxu0 0.0
    %694 = vmatpush1.msra.mxu0 0.0
    %695 = vmatprep.subr.mxu0 0.0
    %696 = vmatpush1.msra.mxu0 0.0
    %697 = vmatprep.subr.mxu0 0.0
    %698 = vmatpush1.msra.mxu0 0.0
    %699 = vmatprep.subr.mxu0 0.0
    %700 = vmatpush1.msra.mxu0 0.0
    %701 = vmatprep.subr.mxu0 0.0
    %702 = vmatpush1.msra.mxu0 0.0
    %703 = vmatprep.subr.mxu0 0.0
    %704 = vmatpush1.msra.mxu0 0.0
    %705 = vmatprep.subr.mxu0 0.0
    %706 = vmatpush1.msra.mxu0 0.0
    %707 = vmatprep.subr.mxu0 0.0
    %708 = vmatpush1.msra.mxu0 0.0
    %709 = vmatprep.subr.mxu0 0.0
    %710 = vmatpush1.msra.mxu0 0.0
    %711 = vmatprep.subr.mxu0 0.0
    %712 = vmatpush1.msra.mxu0 0.0
    %713 = vmatprep.subr.mxu0 0.0
    %714 = vmatpush1.msra.mxu0 0.0
    %715 = vmatprep.subr.mxu0 0.0
    %716 = vmatpush1.msra.mxu0 0.0
    %717 = vmatprep.subr.mxu0 0.0
    %718 = vmatpush1.msra.mxu0 0.0
    %719 = vmatprep.mubr.f32.mxu0 0.0
    %720 = vmatmul.mubr.f32.gmra.mrb[0].mxu0 %v653
    %v721 = vpop.f32.mrb[0].mxu0
    %v722 = vadd.f32 0.0, %v721
    %v723 = vpop.f32.mrb[0].mxu0
    %724 = vdwg.mxu0
    %v726 = vsel %vm89, %v24, 0
    %728 = vmatprep.subr.mxu0 0.0
    %729 = vmatpush1.msra.mxu0 %v44
    %730 = vmatprep.subr.mxu0 0.0
    %731 = vmatpush1.msra.mxu0 %v45
    %732 = vmatprep.subr.mxu0 0.0
    %733 = vmatpush1.msra.mxu0 %v46
    %734 = vmatprep.subr.mxu0 0.0
    %735 = vmatpush1.msra.mxu0 %v47
    %736 = vmatprep.subr.mxu0 0.0
    %737 = vmatpush1.msra.mxu0 0.0
    %738 = vmatprep.subr.mxu0 0.0
    %739 = vmatpush1.msra.mxu0 0.0
    %740 = vmatprep.subr.mxu0 0.0
    %741 = vmatpush1.msra.mxu0 0.0
    %742 = vmatprep.subr.mxu0 0.0
    %743 = vmatpush1.msra.mxu0 0.0
    %744 = vmatprep.subr.mxu0 0.0
    %745 = vmatpush1.msra.mxu0 0.0
    %746 = vmatprep.subr.mxu0 0.0
    %747 = vmatpush1.msra.mxu0 0.0
    %748 = vmatprep.subr.mxu0 0.0
    %749 = vmatpush1.msra.mxu0 0.0
    %750 = vmatprep.subr.mxu0 0.0
    %751 = vmatpush1.msra.mxu0 0.0
    %752 = vmatprep.subr.mxu0 0.0
    %753 = vmatpush1.msra.mxu0 0.0
    %754 = vmatprep.subr.mxu0 0.0
    %755 = vmatpush1.msra.mxu0 0.0
    %756 = vmatprep.subr.mxu0 0.0
    %757 = vmatpush1.msra.mxu0 0.0
    %758 = vmatprep.subr.mxu0 0.0
    %759 = vmatpush1.msra.mxu0 0.0
    %760 = vmatprep.subr.mxu0 0.0
    %761 = vmatpush1.msra.mxu0 0.0
    %762 = vmatprep.subr.mxu0 0.0
    %763 = vmatpush1.msra.mxu0 0.0
    %764 = vmatprep.subr.mxu0 0.0
    %765 = vmatpush1.msra.mxu0 0.0
    %766 = vmatprep.subr.mxu0 0.0
    %767 = vmatpush1.msra.mxu0 0.0
    %768 = vmatprep.subr.mxu0 0.0
    %769 = vmatpush1.msra.mxu0 0.0
    %770 = vmatprep.subr.mxu0 0.0
    %771 = vmatpush1.msra.mxu0 0.0
    %772 = vmatprep.subr.mxu0 0.0
    %773 = vmatpush1.msra.mxu0 0.0
    %774 = vmatprep.subr.mxu0 0.0
    %775 = vmatpush1.msra.mxu0 0.0
    %776 = vmatprep.subr.mxu0 0.0
    %777 = vmatpush1.msra.mxu0 0.0
    %778 = vmatprep.subr.mxu0 0.0
    %779 = vmatpush1.msra.mxu0 0.0
    %780 = vmatprep.subr.mxu0 0.0
    %781 = vmatpush1.msra.mxu0 0.0
    %782 = vmatprep.subr.mxu0 0.0
    %783 = vmatpush1.msra.mxu0 0.0
    %784 = vmatprep.subr.mxu0 0.0
    %785 = vmatpush1.msra.mxu0 0.0
    %786 = vmatprep.subr.mxu0 0.0
    %787 = vmatpush1.msra.mxu0 0.0
    %788 = vmatprep.subr.mxu0 0.0
    %789 = vmatpush1.msra.mxu0 0.0
    %790 = vmatprep.subr.mxu0 0.0
    %791 = vmatpush1.msra.mxu0 0.0
    %792 = vmatprep.mubr.f32.mxu0 0.0
    %793 = vmatmul.mubr.f32.gmra.mrb[0].mxu0 %v726
    %v794 = vpop.f32.mrb[0].mxu0
    %v795 = vadd.f32 %v722, %v794
    %v796 = vpop.f32.mrb[0].mxu0
    %797 = vdwg.mxu0
    %v798 = vlaneseq
    %v799 = vshrl.u32 %v798, 7
    %v800 = vsub.s32 0, %v799
    %v801 = vrot.slane %v78, %v800
    %v802 = vadd.f32 %v795, %v801
    %v803 = vlaneseq
    %v804 = vshrl.u32 %v803, 7
    %v805 = vsub.s32 0, %v804
    %v806 = vrot.slane %v79, %v805
    %v808 = vsel %vm89, %v25, 0
    %810 = vmatprep.subr.mxu0 0.0
    %811 = vmatpush1.msra.mxu0 %v52
    %812 = vmatprep.subr.mxu0 0.0
    %813 = vmatpush1.msra.mxu0 %v53
    %814 = vmatprep.subr.mxu0 0.0
    %815 = vmatpush1.msra.mxu0 %v54
    %816 = vmatprep.subr.mxu0 0.0
    %817 = vmatpush1.msra.mxu0 %v55
    %818 = vmatprep.subr.mxu0 0.0
    %819 = vmatpush1.msra.mxu0 0.0
    %820 = vmatprep.subr.mxu0 0.0
    %821 = vmatpush1.msra.mxu0 0.0
    %822 = vmatprep.subr.mxu0 0.0
    %823 = vmatpush1.msra.mxu0 0.0
    %824 = vmatprep.subr.mxu0 0.0
    %825 = vmatpush1.msra.mxu0 0.0
    %826 = vmatprep.subr.mxu0 0.0
    %827 = vmatpush1.msra.mxu0 0.0
    %828 = vmatprep.subr.mxu0 0.0
    %829 = vmatpush1.msra.mxu0 0.0
    %830 = vmatprep.subr.mxu0 0.0
    %831 = vmatpush1.msra.mxu0 0.0
    %832 = vmatprep.subr.mxu0 0.0
    %833 = vmatpush1.msra.mxu0 0.0
    %834 = vmatprep.subr.mxu0 0.0
    %835 = vmatpush1.msra.mxu0 0.0
    %836 = vmatprep.subr.mxu0 0.0
    %837 = vmatpush1.msra.mxu0 0.0
    %838 = vmatprep.subr.mxu0 0.0
    %839 = vmatpush1.msra.mxu0 0.0
    %840 = vmatprep.subr.mxu0 0.0
    %841 = vmatpush1.msra.mxu0 0.0
    %842 = vmatprep.subr.mxu0 0.0
    %843 = vmatpush1.msra.mxu0 0.0
    %844 = vmatprep.subr.mxu0 0.0
    %845 = vmatpush1.msra.mxu0 0.0
    %846 = vmatprep.subr.mxu0 0.0
    %847 = vmatpush1.msra.mxu0 0.0
    %848 = vmatprep.subr.mxu0 0.0
    %849 = vmatpush1.msra.mxu0 0.0
    %850 = vmatprep.subr.mxu0 0.0
    %851 = vmatpush1.msra.mxu0 0.0
    %852 = vmatprep.subr.mxu0 0.0
    %853 = vmatpush1.msra.mxu0 0.0
    %854 = vmatprep.subr.mxu0 0.0
    %855 = vmatpush1.msra.mxu0 0.0
    %856 = vmatprep.subr.mxu0 0.0
    %857 = vmatpush1.msra.mxu0 0.0
    %858 = vmatprep.subr.mxu0 0.0
    %859 = vmatpush1.msra.mxu0 0.0
    %860 = vmatprep.subr.mxu0 0.0
    %861 = vmatpush1.msra.mxu0 0.0
    %862 = vmatprep.subr.mxu0 0.0
    %863 = vmatpush1.msra.mxu0 0.0
    %864 = vmatprep.subr.mxu0 0.0
    %865 = vmatpush1.msra.mxu0 0.0
    %866 = vmatprep.subr.mxu0 0.0
    %867 = vmatpush1.msra.mxu0 0.0
    %868 = vmatprep.subr.mxu0 0.0
    %869 = vmatpush1.msra.mxu0 0.0
    %870 = vmatprep.subr.mxu0 0.0
    %871 = vmatpush1.msra.mxu0 0.0
    %872 = vmatprep.subr.mxu0 0.0
    %873 = vmatpush1.msra.mxu0 0.0
    %874 = vmatprep.mubr.f32.mxu0 0.0
    %875 = vmatmul.mubr.f32.gmra.mrb[0].mxu0 %v808
    %v876 = vpop.f32.mrb[0].mxu0
    %v877 = vadd.f32 %v806, %v876
    %v878 = vpop.f32.mrb[0].mxu0
    %879 = vdwg.mxu0
    %v880 = vadd.f32 %v802, %v877
    %v881 = vxor.u32 %v880, 2147483648
    %v882 = vmul.f32 %v881, 1.442695
    %v883 = vpow.pop %v882
    %v884 = vadd.f32 %v883, 1.0
    %v885 = vrcp.pop %v884
    %v886 = vmul.f32 1.0, %v885
    %888 = vrot.lane.b32.xlu0 %v877, 64
    %v889 = vpop.permute.xlu0 %888
    %v891 = vmul.f32 %v886, %v889
    %893 = vrot.lane.b32.xlu0 %v891, 64
    %v894 = vpop.permute.xlu0 %893
    %v896 = vadd.f32 %v802, %v894
    %v897 = vtanh.pop %v896
    %v898 = vsub.f32 1.0, %v886
    %900 = vrot.lane.b32.xlu0 %v897, 96
    %v901 = vpop.permute.xlu0 %900
    %v903 = vmul.f32 %v898, %v901
    %904 = vrot.lane.b32.xlu0 %v25, 32
    %v905 = vpop.permute.xlu0 %904
    %v907 = vmul.f32 %v886, %v905
    %v908 = vadd.f32 %v903, %v907
    %v909 = vlaneseq
    %v910 = vshrl.u32 %v909, 7
    %v911 = vsub.s32 0, %v910
    %v912 = vrot.slane %v80, %v911
    %914 = vrot.lane.b32.xlu0 %v908, 96
    %v915 = vpop.permute.xlu0 %914
    %v916 = vsel %vm89, %v915, 0
    %918 = vmatprep.subr.mxu0 0.0
    %919 = vmatpush1.msra.mxu0 %v56
    %920 = vmatprep.subr.mxu0 0.0
    %921 = vmatpush1.msra.mxu0 %v57
    %922 = vmatprep.subr.mxu0 0.0
    %923 = vmatpush1.msra.mxu0 %v58
    %924 = vmatprep.subr.mxu0 0.0
    %925 = vmatpush1.msra.mxu0 %v59
    %926 = vmatprep.subr.mxu0 0.0
    %927 = vmatpush1.msra.mxu0 0.0
    %928 = vmatprep.subr.mxu0 0.0
    %929 = vmatpush1.msra.mxu0 0.0
    %930 = vmatprep.subr.mxu0 0.0
    %931 = vmatpush1.msra.mxu0 0.0
    %932 = vmatprep.subr.mxu0 0.0
    %933 = vmatpush1.msra.mxu0 0.0
    %934 = vmatprep.subr.mxu0 0.0
    %935 = vmatpush1.msra.mxu0 0.0
    %936 = vmatprep.subr.mxu0 0.0
    %937 = vmatpush1.msra.mxu0 0.0
    %938 = vmatprep.subr.mxu0 0.0
    %939 = vmatpush1.msra.mxu0 0.0
    %940 = vmatprep.subr.mxu0 0.0
    %941 = vmatpush1.msra.mxu0 0.0
    %942 = vmatprep.subr.mxu0 0.0
    %943 = vmatpush1.msra.mxu0 0.0
    %944 = vmatprep.subr.mxu0 0.0
    %945 = vmatpush1.msra.mxu0 0.0
    %946 = vmatprep.subr.mxu0 0.0
    %947 = vmatpush1.msra.mxu0 0.0
    %948 = vmatprep.subr.mxu0 0.0
    %949 = vmatpush1.msra.mxu0 0.0
    %950 = vmatprep.subr.mxu0 0.0
    %951 = vmatpush1.msra.mxu0 0.0
    %952 = vmatprep.subr.mxu0 0.0
    %953 = vmatpush1.msra.mxu0 0.0
    %954 = vmatprep.subr.mxu0 0.0
    %955 = vmatpush1.msra.mxu0 0.0
    %956 = vmatprep.subr.mxu0 0.0
    %957 = vmatpush1.msra.mxu0 0.0
    %958 = vmatprep.subr.mxu0 0.0
    %959 = vmatpush1.msra.mxu0 0.0
    %960 = vmatprep.subr.mxu0 0.0
    %961 = vmatpush1.msra.mxu0 0.0
    %962 = vmatprep.subr.mxu0 0.0
    %963 = vmatpush1.msra.mxu0 0.0
    %964 = vmatprep.subr.mxu0 0.0
    %965 = vmatpush1.msra.mxu0 0.0
    %966 = vmatprep.subr.mxu0 0.0
    %967 = vmatpush1.msra.mxu0 0.0
    %968 = vmatprep.subr.mxu0 0.0
    %969 = vmatpush1.msra.mxu0 0.0
    %970 = vmatprep.subr.mxu0 0.0
    %971 = vmatpush1.msra.mxu0 0.0
    %972 = vmatprep.subr.mxu0 0.0
    %973 = vmatpush1.msra.mxu0 0.0
    %974 = vmatprep.subr.mxu0 0.0
    %975 = vmatpush1.msra.mxu0 0.0
    %976 = vmatprep.subr.mxu0 0.0
    %977 = vmatpush1.msra.mxu0 0.0
    %978 = vmatprep.subr.mxu0 0.0
    %979 = vmatpush1.msra.mxu0 0.0
    %980 = vmatprep.subr.mxu0 0.0
    %981 = vmatpush1.msra.mxu0 0.0
    %982 = vmatprep.mubr.f32.mxu0 0.0
    %983 = vmatmul.mubr.f32.gmra.mrb[0].mxu0 %v916
    %v984 = vpop.f32.mrb[0].mxu0
    %v985 = vadd.f32 %v912, %v984
    %v986 = vpop.f32.mrb[0].mxu0
    %987 = vdwg.mxu0
    %v988 = vlaneseq
    %v989 = vshrl.u32 %v988, 7
    %v990 = vsub.s32 0, %v989
    %v991 = vrot.slane %v81, %v990
    %v993 = vsel %vm89, %v26, 0
    %995 = vmatprep.subr.mxu0 0.0
    %996 = vmatpush1.msra.mxu0 %v60
    %997 = vmatprep.subr.mxu0 0.0
    %998 = vmatpush1.msra.mxu0 %v61
    %999 = vmatprep.subr.mxu0 0.0
    %1000 = vmatpush1.msra.mxu0 %v62
    %1001 = vmatprep.subr.mxu0 0.0
    %1002 = vmatpush1.msra.mxu0 %v63
    %1003 = vmatprep.subr.mxu0 0.0
    %1004 = vmatpush1.msra.mxu0 0.0
    %1005 = vmatprep.subr.mxu0 0.0
    %1006 = vmatpush1.msra.mxu0 0.0
    %1007 = vmatprep.subr.mxu0 0.0
    %1008 = vmatpush1.msra.mxu0 0.0
    %1009 = vmatprep.subr.mxu0 0.0
    %1010 = vmatpush1.msra.mxu0 0.0
    %1011 = vmatprep.subr.mxu0 0.0
    %1012 = vmatpush1.msra.mxu0 0.0
    %1013 = vmatprep.subr.mxu0 0.0
    %1014 = vmatpush1.msra.mxu0 0.0
    %1015 = vmatprep.subr.mxu0 0.0
    %1016 = vmatpush1.msra.mxu0 0.0
    %1017 = vmatprep.subr.mxu0 0.0
    %1018 = vmatpush1.msra.mxu0 0.0
    %1019 = vmatprep.subr.mxu0 0.0
    %1020 = vmatpush1.msra.mxu0 0.0
    %1021 = vmatprep.subr.mxu0 0.0
    %1022 = vmatpush1.msra.mxu0 0.0
    %1023 = vmatprep.subr.mxu0 0.0
    %1024 = vmatpush1.msra.mxu0 0.0
    %1025 = vmatprep.subr.mxu0 0.0
    %1026 = vmatpush1.msra.mxu0 0.0
    %1027 = vmatprep.subr.mxu0 0.0
    %1028 = vmatpush1.msra.mxu0 0.0
    %1029 = vmatprep.subr.mxu0 0.0
    %1030 = vmatpush1.msra.mxu0 0.0
    %1031 = vmatprep.subr.mxu0 0.0
    %1032 = vmatpush1.msra.mxu0 0.0
    %1033 = vmatprep.subr.mxu0 0.0
    %1034 = vmatpush1.msra.mxu0 0.0
    %1035 = vmatprep.subr.mxu0 0.0
    %1036 = vmatpush1.msra.mxu0 0.0
    %1037 = vmatprep.subr.mxu0 0.0
    %1038 = vmatpush1.msra.mxu0 0.0
    %1039 = vmatprep.subr.mxu0 0.0
    %1040 = vmatpush1.msra.mxu0 0.0
    %1041 = vmatprep.subr.mxu0 0.0
    %1042 = vmatpush1.msra.mxu0 0.0
    %1043 = vmatprep.subr.mxu0 0.0
    %1044 = vmatpush1.msra.mxu0 0.0
    %1045 = vmatprep.subr.mxu0 0.0
    %1046 = vmatpush1.msra.mxu0 0.0
    %1047 = vmatprep.subr.mxu0 0.0
    %1048 = vmatpush1.msra.mxu0 0.0
    %1049 = vmatprep.subr.mxu0 0.0
    %1050 = vmatpush1.msra.mxu0 0.0
    %1051 = vmatprep.subr.mxu0 0.0
    %1052 = vmatpush1.msra.mxu0 0.0
    %1053 = vmatprep.subr.mxu0 0.0
    %1054 = vmatpush1.msra.mxu0 0.0
    %1055 = vmatprep.subr.mxu0 0.0
    %1056 = vmatpush1.msra.mxu0 0.0
    %1057 = vmatprep.subr.mxu0 0.0
    %1058 = vmatpush1.msra.mxu0 0.0
    %1059 = vmatprep.mubr.f32.mxu0 0.0
    %1060 = vmatmul.mubr.f32.gmra.mrb[0].mxu0 %v993
    %v1061 = vpop.f32.mrb[0].mxu0
    %v1062 = vadd.f32 %v991, %v1061
    %v1063 = vpop.f32.mrb[0].mxu0
    %1064 = vdwg.mxu0
    %v1065 = vadd.f32 %v985, %v1062
    %v1066 = vxor.u32 %v1065, 2147483648
    %v1067 = vmul.f32 %v1066, 1.442695
    %v1068 = vpow.pop %v1067
    %v1069 = vadd.f32 %v1068, 1.0
    %v1070 = vrcp.pop %v1069
    %v1071 = vmul.f32 1.0, %v1070
    %1073 = vrot.lane.b32.xlu0 %v1062, 64
    %v1074 = vpop.permute.xlu0 %1073
    %v1076 = vmul.f32 %v1071, %v1074
    %1078 = vrot.lane.b32.xlu0 %v1076, 64
    %v1079 = vpop.permute.xlu0 %1078
    %v1081 = vadd.f32 %v985, %v1079
    %v1082 = vtanh.pop %v1081
    %v1083 = vsub.f32 1.0, %v1071
    %1085 = vrot.lane.b32.xlu0 %v1082, 96
    %v1086 = vpop.permute.xlu0 %1085
    %v1088 = vmul.f32 %v1083, %v1086
    %1089 = vrot.lane.b32.xlu0 %v26, 32
    %v1090 = vpop.permute.xlu0 %1089
    %v1092 = vmul.f32 %v1071, %v1090
    %v1093 = vadd.f32 %v1088, %v1092
    %1094 = vmatprep.subr.mxu0 0.0
    %1095 = vmatpush1.msra.mxu0 %v68
    %1096 = vmatprep.subr.mxu0 0.0
    %1097 = vmatpush1.msra.mxu0 %v69
    %1098 = vmatprep.subr.mxu0 0.0
    %1099 = vmatpush1.msra.mxu0 %v70
    %1100 = vmatprep.subr.mxu0 0.0
    %1101 = vmatpush1.msra.mxu0 %v71
    %1102 = vmatprep.subr.mxu0 0.0
    %1103 = vmatpush1.msra.mxu0 0.0
    %1104 = vmatprep.subr.mxu0 0.0
    %1105 = vmatpush1.msra.mxu0 0.0
    %1106 = vmatprep.subr.mxu0 0.0
    %1107 = vmatpush1.msra.mxu0 0.0
    %1108 = vmatprep.subr.mxu0 0.0
    %1109 = vmatpush1.msra.mxu0 0.0
    %1110 = vmatprep.subr.mxu0 0.0
    %1111 = vmatpush1.msra.mxu0 0.0
    %1112 = vmatprep.subr.mxu0 0.0
    %1113 = vmatpush1.msra.mxu0 0.0
    %1114 = vmatprep.subr.mxu0 0.0
    %1115 = vmatpush1.msra.mxu0 0.0
    %1116 = vmatprep.subr.mxu0 0.0
    %1117 = vmatpush1.msra.mxu0 0.0
    %1118 = vmatprep.subr.mxu0 0.0
    %1119 = vmatpush1.msra.mxu0 0.0
    %1120 = vmatprep.subr.mxu0 0.0
    %1121 = vmatpush1.msra.mxu0 0.0
    %1122 = vmatprep.subr.mxu0 0.0
    %1123 = vmatpush1.msra.mxu0 0.0
    %1124 = vmatprep.subr.mxu0 0.0
    %1125 = vmatpush1.msra.mxu0 0.0
    %1126 = vmatprep.subr.mxu0 0.0
    %1127 = vmatpush1.msra.mxu0 0.0
    %1128 = vmatprep.subr.mxu0 0.0
    %1129 = vmatpush1.msra.mxu0 0.0
    %1130 = vmatprep.subr.mxu0 0.0
    %1131 = vmatpush1.msra.mxu0 0.0
    %1132 = vmatprep.subr.mxu0 0.0
    %1133 = vmatpush1.msra.mxu0 0.0
    %1134 = vmatprep.subr.mxu0 0.0
    %1135 = vmatpush1.msra.mxu0 0.0
    %1136 = vmatprep.subr.mxu0 0.0
    %1137 = vmatpush1.msra.mxu0 0.0
    %1138 = vmatprep.subr.mxu0 0.0
    %1139 = vmatpush1.msra.mxu0 0.0
    %1140 = vmatprep.subr.mxu0 0.0
    %1141 = vmatpush1.msra.mxu0 0.0
    %1142 = vmatprep.subr.mxu0 0.0
    %1143 = vmatpush1.msra.mxu0 0.0
    %1144 = vmatprep.subr.mxu0 0.0
    %1145 = vmatpush1.msra.mxu0 0.0
    %1146 = vmatprep.subr.mxu0 0.0
    %1147 = vmatpush1.msra.mxu0 0.0
    %1148 = vmatprep.subr.mxu0 0.0
    %1149 = vmatpush1.msra.mxu0 0.0
    %1150 = vmatprep.subr.mxu0 0.0
    %1151 = vmatpush1.msra.mxu0 0.0
    %1152 = vmatprep.subr.mxu0 0.0
    %1153 = vmatpush1.msra.mxu0 0.0
    %1154 = vmatprep.subr.mxu0 0.0
    %1155 = vmatpush1.msra.mxu0 0.0
    %1156 = vmatprep.subr.mxu0 0.0
    %1157 = vmatpush1.msra.mxu0 0.0
    %1158 = vmatprep.mubr.f32.mxu0 0.0
    %1159 = vmatmul.mubr.f32.gmra.mrb[0].mxu0 %v653
    %v1160 = vpop.f32.mrb[0].mxu0
    %v1161 = vadd.f32 0.0, %v1160
    %v1162 = vpop.f32.mrb[0].mxu0
    %1163 = vdwg.mxu0
    %1165 = vrot.lane.b32.xlu0 %v1093, 96
    %v1166 = vpop.permute.xlu0 %1165
    %v1167 = vsel %vm89, %v1166, 0
    %1169 = vmatprep.subr.mxu0 0.0
    %1170 = vmatpush1.msra.mxu0 %v64
    %1171 = vmatprep.subr.mxu0 0.0
    %1172 = vmatpush1.msra.mxu0 %v65
    %1173 = vmatprep.subr.mxu0 0.0
    %1174 = vmatpush1.msra.mxu0 %v66
    %1175 = vmatprep.subr.mxu0 0.0
    %1176 = vmatpush1.msra.mxu0 %v67
    %1177 = vmatprep.subr.mxu0 0.0
    %1178 = vmatpush1.msra.mxu0 0.0
    %1179 = vmatprep.subr.mxu0 0.0
    %1180 = vmatpush1.msra.mxu0 0.0
    %1181 = vmatprep.subr.mxu0 0.0
    %1182 = vmatpush1.msra.mxu0 0.0
    %1183 = vmatprep.subr.mxu0 0.0
    %1184 = vmatpush1.msra.mxu0 0.0
    %1185 = vmatprep.subr.mxu0 0.0
    %1186 = vmatpush1.msra.mxu0 0.0
    %1187 = vmatprep.subr.mxu0 0.0
    %1188 = vmatpush1.msra.mxu0 0.0
    %1189 = vmatprep.subr.mxu0 0.0
    %1190 = vmatpush1.msra.mxu0 0.0
    %1191 = vmatprep.subr.mxu0 0.0
    %1192 = vmatpush1.msra.mxu0 0.0
    %1193 = vmatprep.subr.mxu0 0.0
    %1194 = vmatpush1.msra.mxu0 0.0
    %1195 = vmatprep.subr.mxu0 0.0
    %1196 = vmatpush1.msra.mxu0 0.0
    %1197 = vmatprep.subr.mxu0 0.0
    %1198 = vmatpush1.msra.mxu0 0.0
    %1199 = vmatprep.subr.mxu0 0.0
    %1200 = vmatpush1.msra.mxu0 0.0
    %1201 = vmatprep.subr.mxu0 0.0
    %1202 = vmatpush1.msra.mxu0 0.0
    %1203 = vmatprep.subr.mxu0 0.0
    %1204 = vmatpush1.msra.mxu0 0.0
    %1205 = vmatprep.subr.mxu0 0.0
    %1206 = vmatpush1.msra.mxu0 0.0
    %1207 = vmatprep.subr.mxu0 0.0
    %1208 = vmatpush1.msra.mxu0 0.0
    %1209 = vmatprep.subr.mxu0 0.0
    %1210 = vmatpush1.msra.mxu0 0.0
    %1211 = vmatprep.subr.mxu0 0.0
    %1212 = vmatpush1.msra.mxu0 0.0
    %1213 = vmatprep.subr.mxu0 0.0
    %1214 = vmatpush1.msra.mxu0 0.0
    %1215 = vmatprep.subr.mxu0 0.0
    %1216 = vmatpush1.msra.mxu0 0.0
    %1217 = vmatprep.subr.mxu0 0.0
    %1218 = vmatpush1.msra.mxu0 0.0
    %1219 = vmatprep.subr.mxu0 0.0
    %1220 = vmatpush1.msra.mxu0 0.0
    %1221 = vmatprep.subr.mxu0 0.0
    %1222 = vmatpush1.msra.mxu0 0.0
    %1223 = vmatprep.subr.mxu0 0.0
    %1224 = vmatpush1.msra.mxu0 0.0
    %1225 = vmatprep.subr.mxu0 0.0
    %1226 = vmatpush1.msra.mxu0 0.0
    %1227 = vmatprep.subr.mxu0 0.0
    %1228 = vmatpush1.msra.mxu0 0.0
    %1229 = vmatprep.subr.mxu0 0.0
    %1230 = vmatpush1.msra.mxu0 0.0
    %1231 = vmatprep.subr.mxu0 0.0
    %1232 = vmatpush1.msra.mxu0 0.0
    %1233 = vmatprep.mubr.f32.mxu0 0.0
    %1234 = vmatmul.mubr.f32.gmra.mrb[0].mxu0 %v1167
    %v1235 = vpop.f32.mrb[0].mxu0
    %v1236 = vadd.f32 %v1161, %v1235
    %v1237 = vpop.f32.mrb[0].mxu0
    %1238 = vdwg.mxu0
    %1239 = vmatprep.subr.mxu0 0.0
    %1240 = vmatpush1.msra.mxu0 %v72
    %1241 = vmatprep.subr.mxu0 0.0
    %1242 = vmatpush1.msra.mxu0 %v73
    %1243 = vmatprep.subr.mxu0 0.0
    %1244 = vmatpush1.msra.mxu0 %v74
    %1245 = vmatprep.subr.mxu0 0.0
    %1246 = vmatpush1.msra.mxu0 %v75
    %1247 = vmatprep.subr.mxu0 0.0
    %1248 = vmatpush1.msra.mxu0 0.0
    %1249 = vmatprep.subr.mxu0 0.0
    %1250 = vmatpush1.msra.mxu0 0.0
    %1251 = vmatprep.subr.mxu0 0.0
    %1252 = vmatpush1.msra.mxu0 0.0
    %1253 = vmatprep.subr.mxu0 0.0
    %1254 = vmatpush1.msra.mxu0 0.0
    %1255 = vmatprep.subr.mxu0 0.0
    %1256 = vmatpush1.msra.mxu0 0.0
    %1257 = vmatprep.subr.mxu0 0.0
    %1258 = vmatpush1.msra.mxu0 0.0
    %1259 = vmatprep.subr.mxu0 0.0
    %1260 = vmatpush1.msra.mxu0 0.0
    %1261 = vmatprep.subr.mxu0 0.0
    %1262 = vmatpush1.msra.mxu0 0.0
    %1263 = vmatprep.subr.mxu0 0.0
    %1264 = vmatpush1.msra.mxu0 0.0
    %1265 = vmatprep.subr.mxu0 0.0
    %1266 = vmatpush1.msra.mxu0 0.0
    %1267 = vmatprep.subr.mxu0 0.0
    %1268 = vmatpush1.msra.mxu0 0.0
    %1269 = vmatprep.subr.mxu0 0.0
    %1270 = vmatpush1.msra.mxu0 0.0
    %1271 = vmatprep.subr.mxu0 0.0
    %1272 = vmatpush1.msra.mxu0 0.0
    %1273 = vmatprep.subr.mxu0 0.0
    %1274 = vmatpush1.msra.mxu0 0.0
    %1275 = vmatprep.subr.mxu0 0.0
    %1276 = vmatpush1.msra.mxu0 0.0
    %1277 = vmatprep.subr.mxu0 0.0
    %1278 = vmatpush1.msra.mxu0 0.0
    %1279 = vmatprep.subr.mxu0 0.0
    %1280 = vmatpush1.msra.mxu0 0.0
    %1281 = vmatprep.subr.mxu0 0.0
    %1282 = vmatpush1.msra.mxu0 0.0
    %1283 = vmatprep.subr.mxu0 0.0
    %1284 = vmatpush1.msra.mxu0 0.0
    %1285 = vmatprep.subr.mxu0 0.0
    %1286 = vmatpush1.msra.mxu0 0.0
    %1287 = vmatprep.subr.mxu0 0.0
    %1288 = vmatpush1.msra.mxu0 0.0
    %1289 = vmatprep.subr.mxu0 0.0
    %1290 = vmatpush1.msra.mxu0 0.0
    %1291 = vmatprep.subr.mxu0 0.0
    %1292 = vmatpush1.msra.mxu0 0.0
    %1293 = vmatprep.subr.mxu0 0.0
    %1294 = vmatpush1.msra.mxu0 0.0
    %1295 = vmatprep.subr.mxu0 0.0
    %1296 = vmatpush1.msra.mxu0 0.0
    %1297 = vmatprep.subr.mxu0 0.0
    %1298 = vmatpush1.msra.mxu0 0.0
    %1299 = vmatprep.subr.mxu0 0.0
    %1300 = vmatpush1.msra.mxu0 0.0
    %1301 = vmatprep.subr.mxu0 0.0
    %1302 = vmatpush1.msra.mxu0 0.0
    %1303 = vmatprep.mubr.f32.mxu0 0.0
    %1304 = vmatmul.mubr.f32.gmra.mrb[0].mxu0 %v726
    %v1305 = vpop.f32.mrb[0].mxu0
    %v1306 = vadd.f32 0.0, %v1305
    %v1307 = vpop.f32.mrb[0].mxu0
    %1308 = vdwg.mxu0
    %v1309 = vadd.f32 %v1236, %v1306
    %v1310 = vlaneseq
    %v1311 = vshrl.u32 %v1310, 7
    %v1312 = vsub.s32 0, %v1311
    %v1313 = vrot.slane %v82, %v1312
    %v1314 = vadd.f32 %v1309, %v1313
    %vm1315 = vcmask 130048
    %1316 = vst.msk [vmem:[#allocation2] sm:$0xff] %vm1315, %v1314
    %1318 = vst.msk [vmem:[#allocation4] sm:$0xff] %vm89, %v915
    %s1320 = scalar_lea.vmem [#allocation4], 8
    %1321 = vst.msk [vmem:[%s1320] sm:$0xff] %vm89, %v1166
    // Predicated region
    $region22: #{decoder_act_forward.1} parent=1 // pred_check
      _
    $region23: #{decoder_act_forward.1} parent=1 // pred_check_branch
      %1323 = sbr.rel (0) target = $region25
    $region24: #{decoder_act_forward.1} parent=1 // pred_region
      %s1325 = ssub.s32 128, 128
      %1326 = vsyncadd [#allocation3], %s1325
      %s1328 = sshll.u32 [#allocation2], 4
      %s1329 = int_to_ptr.vmem [resolvable:$true] %s1328
      %1331 = dma.vmem_to_hbm [thread:$0]  %s1329, 128, %s5, [#allocation3]
    $region25: #{decoder_act_forward.1} parent=1 // pred_fallthru
      _
    // Predicated region
    $region26: #{decoder_act_forward.1} parent=1 // pred_check
      _
    $region27: #{decoder_act_forward.1} parent=1 // pred_check_branch
      %1333 = sbr.rel (0) target = $region29
    $region28: #{decoder_act_forward.1} parent=1 // pred_region
      %s1335 = ssub.s32 256, 256
      %1336 = vsyncadd [#allocation5], %s1335
      %s1337 = sshll.u32 [#allocation4], 4
      %s1338 = int_to_ptr.vmem [resolvable:$true] %s1337
      %1343 = dma.vmem_to_hbm [thread:$0]  %s1338, 256, %s6, [#allocation5], 128, 128, 8
    $region29: #{decoder_act_forward.1} parent=1 // pred_fallthru
      _
    // Predicated region
    $region30: #{decoder_act_forward.1} parent=1 // pred_check
      _
    $region31: #{decoder_act_forward.1} parent=1 // pred_check_branch
      %1345 = sbr.rel (0) target = $region33
    $region32: #{decoder_act_forward.1} parent=1 // pred_region
      %1346 = dma.done [#allocation3], 128
    $region33: #{decoder_act_forward.1} parent=1 // pred_fallthru
      _
    // Predicated region
    $region34: #{decoder_act_forward.1} parent=1 // pred_check
      _
    $region35: #{decoder_act_forward.1} parent=1 // pred_check_branch
      %1348 = sbr.rel (0) target = $region37
    $region36: #{decoder_act_forward.1} parent=1 // pred_region
      %1349 = dma.done [#allocation5], 256
    $region37: #{decoder_act_forward.1} parent=1 // pred_fallthru
      _
    %1350 = vsyncpa [#allocation3], 1
    %1351 = vsyncpa [#allocation5], 1

</llo_original>
